<compile_context>
chip_gen: v5e
topology: v5e:2x2
jax: 0.10.0
libtpu: 0.0.40
codegen_flags: <defaults>
</compile_context>

<pallas_src>
import jax
import jax.numpy as jnp
from jax import lax
from jax.experimental import pallas as pl
from jax.experimental.pallas import tpu as pltpu


def decoder_kernel(
    oh_ref,         # (T, TB, V)   bf16 one-hot decoder word ids (time-major)
    emb_ref,        # (V, Dw)      bf16 embedding table
    enc_state_ref,  # (TB, H)      f32 encoder state (h0 == c0)
    wih_ref,        # (Dw, 4H)     bf16 LSTM W_ih^T
    b_ref,          # (1, 4H)      f32 (b_ih + b_hh) pre-summed
    whh_ref,        # (H, 4H)      f32 LSTM W_hh^T (f32 for recurrence accuracy)
    wfc_ref,        # (H, V)       bf16 output fc weight^T
    bfc_ref,        # (1, V)       f32 fc bias
    out_ref,        # (T, TB, V)   f32 per-step logits
    xg_scr,         # (T, TB, 4H)  f32 scratch: input-side gate preactivations
    hall_scr,       # (T, TB, H)   f32 scratch: hidden state of every step
    h_scr,          # (TB, H)      f32 scratch
    c_scr,          # (TB, H)      f32 scratch
):
    T, TB, V = oh_ref.shape
    H = h_scr.shape[1]

    # ---- Hoisted, batched over T*TB: embedding gather (exact one-hot matmul)
    #      and the input-side gate projection.  One big MXU matmul each instead
    #      of T tiny M=B matmuls inside the recurrence.
    oh = oh_ref[...].reshape(T * TB, V)                                   # bf16
    embeds = jnp.dot(oh, emb_ref[...],
                     preferred_element_type=jnp.float32)                  # (T*TB, Dw) f32
    xg = jnp.dot(embeds.astype(jnp.bfloat16), wih_ref[...],
                 preferred_element_type=jnp.float32) + b_ref[...]         # (T*TB, 4H) f32
    xg_scr[...] = xg.reshape(T, TB, 4 * H)

    # ---- init_dec_state: h0 = c0 = encoder_state (num_layers == 1) ----
    h_scr[...] = enc_state_ref[...]
    c_scr[...] = enc_state_ref[...]

    # ---- Recurrent LSTM loop: only the h-dependent matmul stays inside. ----
    # NOTE: with H not a multiple of 128 the gate slices cross lane tiles; for
    # production configs keep H a multiple of 128 so i/f/g/o slices are free.
    def step(t, carry):
        h = h_scr[...]
        c = c_scr[...]
        gates = xg_scr[t] + jnp.dot(h, whh_ref[...],
                                    preferred_element_type=jnp.float32)   # (TB, 4H)
        i_g = jax.nn.sigmoid(gates[:, 0 * H:1 * H])
        f_g = jax.nn.sigmoid(gates[:, 1 * H:2 * H])
        g_g = jnp.tanh(gates[:, 2 * H:3 * H])
        o_g = jax.nn.sigmoid(gates[:, 3 * H:4 * H])
        c_new = f_g * c + i_g * g_g
        h_new = o_g * jnp.tanh(c_new)
        h_scr[...] = h_new
        c_scr[...] = c_new
        hall_scr[t] = h_new
        return carry

    lax.fori_loop(0, T, step, 0, unroll=True)   # short fixed T: full unroll

    # ---- Hoisted output projection over all T*TB rows at once. ----
    hflat = hall_scr[...].reshape(T * TB, H).astype(jnp.bfloat16)
    logits = jnp.dot(hflat, wfc_ref[...],
                     preferred_element_type=jnp.float32) + bfc_ref[...]   # (T*TB, V)
    out_ref[...] = logits.reshape(T, TB, V)


def decoder_forward(params, inputs, encoder_state, *, batch_tile=None):
    """inputs: (B, T) int32; encoder_state: (B, H) f32 -> logits (B*T, V)."""
    B, T = inputs.shape
    V, Dw = params["emb"].shape
    H = encoder_state.shape[1]
    tb = B if batch_tile is None else batch_tile
    assert B % tb == 0

    # TODO(synk): for large vocabularies replace the one-hot with an int-id gather
    # (scalar-prefetch / Element-indexed BlockSpec); bf16 one-hot is the minimal fix.
    oh = jax.nn.one_hot(inputs, V, dtype=jnp.bfloat16)    # (B, T, V)
    oh = jnp.transpose(oh, (1, 0, 2))                     # (T, B, V) time-major

    emb_bf = params["emb"].astype(jnp.bfloat16)           # (V, Dw)
    wih_bf = params["wih"].astype(jnp.bfloat16)           # (Dw, 4H)
    wfc_bf = params["wfc"].astype(jnp.bfloat16)           # (H, V)
    b_all = (params["bih"] + params["bhh"]).astype(jnp.float32)   # (1, 4H)
    whh = params["whh"].astype(jnp.float32)               # (H, 4H)
    bfc = params["bfc"].astype(jnp.float32)               # (1, V)
    enc = encoder_state.astype(jnp.float32)

    grid = (B // tb,)
    out = pl.pallas_call(
        decoder_kernel,
        out_shape=jax.ShapeDtypeStruct((T, B, V), jnp.float32),
        grid_spec=pltpu.PrefetchScalarGridSpec(
            num_scalar_prefetch=0,
            grid=grid,
            in_specs=[
                pl.BlockSpec((T, tb, V), lambda b: (0, b, 0)),   # one-hot ids
                pl.BlockSpec((V, Dw), lambda b: (0, 0)),         # embedding table
                pl.BlockSpec((tb, H), lambda b: (b, 0)),         # encoder state
                pl.BlockSpec((Dw, 4 * H), lambda b: (0, 0)),     # W_ih^T
                pl.BlockSpec((1, 4 * H), lambda b: (0, 0)),      # b_ih + b_hh
                pl.BlockSpec((H, 4 * H), lambda b: (0, 0)),      # W_hh^T
                pl.BlockSpec((H, V), lambda b: (0, 0)),          # fc weight^T
                pl.BlockSpec((1, V), lambda b: (0, 0)),          # fc bias
            ],
            out_specs=pl.BlockSpec((T, tb, V), lambda b: (0, b, 0)),
            scratch_shapes=[
                pltpu.VMEM((T, tb, 4 * H), jnp.float32),   # precomputed input gates
                pltpu.VMEM((T, tb, H), jnp.float32),       # all hidden states
                pltpu.VMEM((tb, H), jnp.float32),          # h
                pltpu.VMEM((tb, H), jnp.float32),          # c
            ]),
        compiler_params=pltpu.CompilerParams(
            dimension_semantics=("parallel",),             # batch tiles -> megacore
            vmem_limit_bytes=32 * 1024 * 1024),            # sized well above footprint
    )(oh, emb_bf, enc, wih_bf, b_all, whh, wfc_bf, bfc)

    # torch: outs (B, T, H).view(-1, H) -> fc  =>  row order is batch-major.
    return jnp.transpose(out, (1, 0, 2)).reshape(B * T, V)


def reference_forward(params, inputs, encoder_state):
    """Pure-JAX f32 reference for verification (mirrors the torch module)."""
    B, T = inputs.shape
    V, _ = params["emb"].shape
    H = encoder_state.shape[1]
    embeds = params["emb"][inputs]            # (B, T, Dw)
    h = encoder_state
    c = encoder_state
    outs = []
    for t in range(T):
        gates = (embeds[:, t] @ params["wih"] + params["bih"]
                 + h @ params["whh"] + params["bhh"])
        i_g = jax.nn.sigmoid(gates[:, :H])
        f_g = jax.nn.sigmoid(gates[:, H:2 * H])
        g_g = jnp.tanh(gates[:, 2 * H:3 * H])
        o_g = jax.nn.sigmoid(gates[:, 3 * H:])
        c = f_g * c + i_g * g_g
        h = o_g * jnp.tanh(c)
        outs.append(h)
    outs = jnp.stack(outs, 1).reshape(B * T, H)
    return outs @ params["wfc"] + params["bfc"]


def init_params(key, num_words, dim_word, hidden_size):
    V, Dw, H = num_words, dim_word, hidden_size
    keys = jax.random.split(key, 5)
    ortho = jax.nn.initializers.orthogonal()
    # torch layout: weight_ih (4H, Dw), weight_hh (4H, H); gate order (i, f, g, o);
    # bias_ih forget-gate slice initialized to 1, bias_hh = 0.
    w_ih = ortho(keys[0], (4 * H, Dw), jnp.float32)
    w_hh = ortho(keys[1], (4 * H, H), jnp.float32)
    b_ih = jnp.zeros((4 * H,), jnp.float32).at[H:2 * H].set(1.0)
    b_hh = jnp.zeros((4 * H,), jnp.float32)
    params = dict(
        emb=jax.random.normal(keys[2], (V, Dw)) * 0.1,
        wih=w_ih.T,               # (Dw, 4H)
        bih=b_ih[None, :],        # (1, 4H)
        whh=w_hh.T,               # (H, 4H)
        bhh=b_hh[None, :],        # (1, 4H)
        wfc=jax.random.normal(keys[3], (H, V)) * 0.1,
        bfc=(jax.random.normal(keys[4], (V,)) * 0.1)[None, :],
    )
    return {k: v.astype(jnp.float32) for k, v in params.items()}


if __name__ == "__main__":
    # TODO(synk): schedule_sampling branch (torch.multinomial resampling) not
    # implemented; config.schedule_sampling=False path is reproduced. Dropout is
    # identity (eval / p=0).
    B, T = 2, 8
    V, Dw, H = 128, 32, 32

    key = jax.random.PRNGKey(0)
    pkey, ikey, skey = jax.random.split(key, 3)
    params = init_params(pkey, V, Dw, H)

    inputs = jax.random.randint(ikey, (B, T), 0, V, dtype=jnp.int32)
    encoder_state = jax.random.normal(skey, (B, H), jnp.float32)

    logits = decoder_forward(params, inputs, encoder_state)
    logits = jax.block_until_ready(logits)

    ref = reference_forward(params, inputs, encoder_state)
    assert logits.shape == (B * T, V), logits.shape
    max_err = float(jnp.max(jnp.abs(logits - ref)))
    # bf16 matmul operands (f32 accumulation) -> small, bounded mismatch vs f32 ref.
    assert max_err < 1e-2, f"max abs err {max_err}"
    print("KERNEL_OK")
</pallas_src>

<mosaic_0001>
module attributes {stable_mosaic.version = 11 : i64} {
  func.func @decoder_kernel(%arg0: i32, %arg1: memref<8x2x128xbf16, #tpu.memory_space<vmem>>, %arg2: memref<128x32xbf16, #tpu.memory_space<vmem>>, %arg3: memref<2x32xf32, #tpu.memory_space<vmem>>, %arg4: memref<32x128xbf16, #tpu.memory_space<vmem>>, %arg5: memref<1x128xf32, #tpu.memory_space<vmem>>, %arg6: memref<32x128xf32, #tpu.memory_space<vmem>>, %arg7: memref<32x128xbf16, #tpu.memory_space<vmem>>, %arg8: memref<1x128xf32, #tpu.memory_space<vmem>>, %arg9: memref<8x2x128xf32, #tpu.memory_space<vmem>>, %arg10: memref<8x2x128xf32, #tpu.memory_space<vmem>>, %arg11: memref<8x2x32xf32, #tpu.memory_space<vmem>>, %arg12: memref<2x32xf32, #tpu.memory_space<vmem>>, %arg13: memref<2x32xf32, #tpu.memory_space<vmem>>) attributes {dimension_semantics = [#tpu.dimension_semantics<parallel>], iteration_bounds = array<i64: 1>, scalar_prefetch = 0 : i64, scratch_operands = 4 : i64, tpu.core_type = #tpu.core_type<tc>, window_params = [{transform_indices = @transform_0, window_bounds = array<i64: 8, 2, 128>}, {pipeline_mode = #tpu.pipeline_mode<synchronous>, transform_indices = @transform_1, window_bounds = array<i64: 128, 32>}, {transform_indices = @transform_2, window_bounds = array<i64: 2, 32>}, {pipeline_mode = #tpu.pipeline_mode<synchronous>, transform_indices = @transform_3, window_bounds = array<i64: 32, 128>}, {pipeline_mode = #tpu.pipeline_mode<synchronous>, transform_indices = @transform_4, window_bounds = array<i64: 1, 128>}, {pipeline_mode = #tpu.pipeline_mode<synchronous>, transform_indices = @transform_5, window_bounds = array<i64: 32, 128>}, {pipeline_mode = #tpu.pipeline_mode<synchronous>, transform_indices = @transform_6, window_bounds = array<i64: 32, 128>}, {pipeline_mode = #tpu.pipeline_mode<synchronous>, transform_indices = @transform_7, window_bounds = array<i64: 1, 128>}, {transform_indices = @transform_8, window_bounds = array<i64: 8, 2, 128>}]} {
    %c0 = arith.constant 0 : index
    %c0_0 = arith.constant 0 : index
    %c0_1 = arith.constant 0 : index
    %0 = vector.load %arg1[%c0, %c0_0, %c0_1] : memref<8x2x128xbf16, #tpu.memory_space<vmem>>, vector<8x2x128xbf16>
    %1 = vector.shape_cast %0 : vector<8x2x128xbf16> to vector<16x128xbf16>
    %c0_2 = arith.constant 0 : index
    %c0_3 = arith.constant 0 : index
    %2 = vector.load %arg2[%c0_2, %c0_3] : memref<128x32xbf16, #tpu.memory_space<vmem>>, vector<128x32xbf16>
    %cst = arith.constant dense<0.000000e+00> : vector<16x32xf32>
    %3 = tpu.matmul %1, %2, %cst {dimension_numbers = #tpu.dot_dimension_numbers<[1], [0], [0], [1], [0, 0, 1, 1], [], []>} : vector<16x128xbf16>, vector<128x32xbf16>, vector<16x32xf32> -> vector<16x32xf32>
    %4 = arith.truncf %3 : vector<16x32xf32> to vector<16x32xbf16>
    %c0_4 = arith.constant 0 : index
    %c0_5 = arith.constant 0 : index
    %5 = vector.load %arg4[%c0_4, %c0_5] : memref<32x128xbf16, #tpu.memory_space<vmem>>, vector<32x128xbf16>
    %cst_6 = arith.constant dense<0.000000e+00> : vector<16x128xf32>
    %6 = tpu.matmul %4, %5, %cst_6 {dimension_numbers = #tpu.dot_dimension_numbers<[1], [0], [0], [1], [0, 0, 1, 1], [], []>} : vector<16x32xbf16>, vector<32x128xbf16>, vector<16x128xf32> -> vector<16x128xf32>
    %c0_7 = arith.constant 0 : index
    %c0_8 = arith.constant 0 : index
    %7 = vector.load %arg5[%c0_7, %c0_8] : memref<1x128xf32, #tpu.memory_space<vmem>>, vector<1x128xf32>
    %8 = vector.broadcast %7 : vector<1x128xf32> to vector<16x128xf32>
    %9 = arith.addf %6, %8 : vector<16x128xf32>
    %10 = vector.shape_cast %9 : vector<16x128xf32> to vector<8x2x128xf32>
    %c0_9 = arith.constant 0 : index
    %c0_10 = arith.constant 0 : index
    %c0_11 = arith.constant 0 : index
    %11 = vector.load %arg10[%c0_9, %c0_10, %c0_11] : memref<8x2x128xf32, #tpu.memory_space<vmem>>, vector<8x2x128xf32>
    tpu.vector_store %arg10[%c0_9, %c0_10, %c0_11], %10 {strides = array<i32>} : memref<8x2x128xf32, #tpu.memory_space<vmem>>, vector<8x2x128xf32>,
    %c0_12 = arith.constant 0 : index
    %c0_13 = arith.constant 0 : index
    %12 = vector.load %arg3[%c0_12, %c0_13] : memref<2x32xf32, #tpu.memory_space<vmem>>, vector<2x32xf32>
    %c0_14 = arith.constant 0 : index
    %c0_15 = arith.constant 0 : index
    %13 = vector.load %arg12[%c0_14, %c0_15] : memref<2x32xf32, #tpu.memory_space<vmem>>, vector<2x32xf32>
    tpu.vector_store %arg12[%c0_14, %c0_15], %12 {strides = array<i32>} : memref<2x32xf32, #tpu.memory_space<vmem>>, vector<2x32xf32>,
    %c0_16 = arith.constant 0 : index
    %c0_17 = arith.constant 0 : index
    %14 = vector.load %arg3[%c0_16, %c0_17] : memref<2x32xf32, #tpu.memory_space<vmem>>, vector<2x32xf32>
    %c0_18 = arith.constant 0 : index
    %c0_19 = arith.constant 0 : index
    %15 = vector.load %arg13[%c0_18, %c0_19] : memref<2x32xf32, #tpu.memory_space<vmem>>, vector<2x32xf32>
    tpu.vector_store %arg13[%c0_18, %c0_19], %14 {strides = array<i32>} : memref<2x32xf32, #tpu.memory_space<vmem>>, vector<2x32xf32>,
    %c0_i32 = arith.constant 0 : i32
    %c0_20 = arith.constant 0 : index
    %c0_21 = arith.constant 0 : index
    %16 = vector.load %arg12[%c0_20, %c0_21] : memref<2x32xf32, #tpu.memory_space<vmem>>, vector<2x32xf32>
    %c0_22 = arith.constant 0 : index
    %c0_23 = arith.constant 0 : index
    %17 = vector.load %arg13[%c0_22, %c0_23] : memref<2x32xf32, #tpu.memory_space<vmem>>, vector<2x32xf32>
    %18 = arith.index_cast %c0_i32 : i32 to index
    %c0_24 = arith.constant 0 : index
    %c0_25 = arith.constant 0 : index
    %19 = vector.load %arg10[%18, %c0_24, %c0_25] : memref<8x2x128xf32, #tpu.memory_space<vmem>>, vector<1x2x128xf32>
    %20 = vector.shape_cast %19 : vector<1x2x128xf32> to vector<2x128xf32>
    %c0_26 = arith.constant 0 : index
    %c0_27 = arith.constant 0 : index
    %21 = vector.load %arg6[%c0_26, %c0_27] : memref<32x128xf32, #tpu.memory_space<vmem>>, vector<32x128xf32>
    %cst_28 = arith.constant dense<0.000000e+00> : vector<2x128xf32>
    %22 = tpu.matmul %16, %21, %cst_28 {dimension_numbers = #tpu.dot_dimension_numbers<[1], [0], [0], [1], [0, 0, 1, 1], [], []>} : vector<2x32xf32>, vector<32x128xf32>, vector<2x128xf32> -> vector<2x128xf32>
    %23 = arith.addf %20, %22 : vector<2x128xf32>
    %24 = vector.extract_strided_slice %23 {offsets = [0, 0], sizes = [2, 32], strides = [1, 1]} : vector<2x128xf32> to vector<2x32xf32>
    %25 = arith.negf %24 : vector<2x32xf32>
    %26 = math.exp %25 : vector<2x32xf32>
    %cst_29 = arith.constant 1.000000e+00 : f32
    %27 = vector.broadcast %cst_29 : f32 to vector<2x32xf32>
    %28 = arith.addf %27, %26 : vector<2x32xf32>
    %29 = arith.divf %27, %28 : vector<2x32xf32>
    %30 = vector.extract_strided_slice %23 {offsets = [0, 32], sizes = [2, 32], strides = [1, 1]} : vector<2x128xf32> to vector<2x32xf32>
    %31 = arith.negf %30 : vector<2x32xf32>
    %32 = math.exp %31 : vector<2x32xf32>
    %cst_30 = arith.constant 1.000000e+00 : f32
    %33 = vector.broadcast %cst_30 : f32 to vector<2x32xf32>
    %34 = arith.addf %33, %32 : vector<2x32xf32>
    %35 = arith.divf %33, %34 : vector<2x32xf32>
    %36 = vector.extract_strided_slice %23 {offsets = [0, 64], sizes = [2, 32], strides = [1, 1]} : vector<2x128xf32> to vector<2x32xf32>
    %37 = math.tanh %36 : vector<2x32xf32>
    %38 = vector.extract_strided_slice %23 {offsets = [0, 96], sizes = [2, 32], strides = [1, 1]} : vector<2x128xf32> to vector<2x32xf32>
    %39 = arith.negf %38 : vector<2x32xf32>
    %40 = math.exp %39 : vector<2x32xf32>
    %cst_31 = arith.constant 1.000000e+00 : f32
    %41 = vector.broadcast %cst_31 : f32 to vector<2x32xf32>
    %42 = arith.addf %41, %40 : vector<2x32xf32>
    %43 = arith.divf %41, %42 : vector<2x32xf32>
    %44 = arith.mulf %35, %17 : vector<2x32xf32>
    %45 = arith.mulf %29, %37 : vector<2x32xf32>
    %46 = arith.addf %44, %45 : vector<2x32xf32>
    %47 = math.tanh %46 : vector<2x32xf32>
    %48 = arith.mulf %43, %47 : vector<2x32xf32>
    %c0_32 = arith.constant 0 : index
    %c0_33 = arith.constant 0 : index
    %49 = vector.load %arg12[%c0_32, %c0_33] : memref<2x32xf32, #tpu.memory_space<vmem>>, vector<2x32xf32>
    tpu.vector_store %arg12[%c0_32, %c0_33], %48 {strides = array<i32>} : memref<2x32xf32, #tpu.memory_space<vmem>>, vector<2x32xf32>,
    %c0_34 = arith.constant 0 : index
    %c0_35 = arith.constant 0 : index
    %50 = vector.load %arg13[%c0_34, %c0_35] : memref<2x32xf32, #tpu.memory_space<vmem>>, vector<2x32xf32>
    tpu.vector_store %arg13[%c0_34, %c0_35], %46 {strides = array<i32>} : memref<2x32xf32, #tpu.memory_space<vmem>>, vector<2x32xf32>,
    %51 = arith.index_cast %c0_i32 : i32 to index
    %c0_36 = arith.constant 0 : index
    %c0_37 = arith.constant 0 : index
    %52 = vector.load %arg11[%51, %c0_36, %c0_37] : memref<8x2x32xf32, #tpu.memory_space<vmem>>, vector<1x2x32xf32>
    %53 = vector.shape_cast %52 : vector<1x2x32xf32> to vector<2x32xf32>
    %54 = vector.shape_cast %48 : vector<2x32xf32> to vector<1x2x32xf32>
    tpu.vector_store %arg11[%51, %c0_36, %c0_37], %54 {strides = array<i32>} : memref<8x2x32xf32, #tpu.memory_space<vmem>>, vector<1x2x32xf32>,
    %c1_i32 = arith.constant 1 : i32
    %c0_38 = arith.constant 0 : index
    %c0_39 = arith.constant 0 : index
    %55 = vector.load %arg12[%c0_38, %c0_39] : memref<2x32xf32, #tpu.memory_space<vmem>>, vector<2x32xf32>
    %c0_40 = arith.constant 0 : index
    %c0_41 = arith.constant 0 : index
    %56 = vector.load %arg13[%c0_40, %c0_41] : memref<2x32xf32, #tpu.memory_space<vmem>>, vector<2x32xf32>
    %57 = arith.index_cast %c1_i32 : i32 to index
    %c0_42 = arith.constant 0 : index
    %c0_43 = arith.constant 0 : index
    %58 = vector.load %arg10[%57, %c0_42, %c0_43] : memref<8x2x128xf32, #tpu.memory_space<vmem>>, vector<1x2x128xf32>
    %59 = vector.shape_cast %58 : vector<1x2x128xf32> to vector<2x128xf32>
    %c0_44 = arith.constant 0 : index
    %c0_45 = arith.constant 0 : index
    %60 = vector.load %arg6[%c0_44, %c0_45] : memref<32x128xf32, #tpu.memory_space<vmem>>, vector<32x128xf32>
    %cst_46 = arith.constant dense<0.000000e+00> : vector<2x128xf32>
    %61 = tpu.matmul %55, %60, %cst_46 {dimension_numbers = #tpu.dot_dimension_numbers<[1], [0], [0], [1], [0, 0, 1, 1], [], []>} : vector<2x32xf32>, vector<32x128xf32>, vector<2x128xf32> -> vector<2x128xf32>
    %62 = arith.addf %59, %61 : vector<2x128xf32>
    %63 = vector.extract_strided_slice %62 {offsets = [0, 0], sizes = [2, 32], strides = [1, 1]} : vector<2x128xf32> to vector<2x32xf32>
    %64 = arith.negf %63 : vector<2x32xf32>
    %65 = math.exp %64 : vector<2x32xf32>
    %cst_47 = arith.constant 1.000000e+00 : f32
    %66 = vector.broadcast %cst_47 : f32 to vector<2x32xf32>
    %67 = arith.addf %66, %65 : vector<2x32xf32>
    %68 = arith.divf %66, %67 : vector<2x32xf32>
    %69 = vector.extract_strided_slice %62 {offsets = [0, 32], sizes = [2, 32], strides = [1, 1]} : vector<2x128xf32> to vector<2x32xf32>
    %70 = arith.negf %69 : vector<2x32xf32>
    %71 = math.exp %70 : vector<2x32xf32>
    %cst_48 = arith.constant 1.000000e+00 : f32
    %72 = vector.broadcast %cst_48 : f32 to vector<2x32xf32>
    %73 = arith.addf %72, %71 : vector<2x32xf32>
    %74 = arith.divf %72, %73 : vector<2x32xf32>
    %75 = vector.extract_strided_slice %62 {offsets = [0, 64], sizes = [2, 32], strides = [1, 1]} : vector<2x128xf32> to vector<2x32xf32>
    %76 = math.tanh %75 : vector<2x32xf32>
    %77 = vector.extract_strided_slice %62 {offsets = [0, 96], sizes = [2, 32], strides = [1, 1]} : vector<2x128xf32> to vector<2x32xf32>
    %78 = arith.negf %77 : vector<2x32xf32>
    %79 = math.exp %78 : vector<2x32xf32>
    %cst_49 = arith.constant 1.000000e+00 : f32
    %80 = vector.broadcast %cst_49 : f32 to vector<2x32xf32>
    %81 = arith.addf %80, %79 : vector<2x32xf32>
    %82 = arith.divf %80, %81 : vector<2x32xf32>
    %83 = arith.mulf %74, %56 : vector<2x32xf32>
    %84 = arith.mulf %68, %76 : vector<2x32xf32>
    %85 = arith.addf %83, %84 : vector<2x32xf32>
    %86 = math.tanh %85 : vector<2x32xf32>
    %87 = arith.mulf %82, %86 : vector<2x32xf32>
    %c0_50 = arith.constant 0 : index
    %c0_51 = arith.constant 0 : index
    %88 = vector.load %arg12[%c0_50, %c0_51] : memref<2x32xf32, #tpu.memory_space<vmem>>, vector<2x32xf32>
    tpu.vector_store %arg12[%c0_50, %c0_51], %87 {strides = array<i32>} : memref<2x32xf32, #tpu.memory_space<vmem>>, vector<2x32xf32>,
    %c0_52 = arith.constant 0 : index
    %c0_53 = arith.constant 0 : index
    %89 = vector.load %arg13[%c0_52, %c0_53] : memref<2x32xf32, #tpu.memory_space<vmem>>, vector<2x32xf32>
    tpu.vector_store %arg13[%c0_52, %c0_53], %85 {strides = array<i32>} : memref<2x32xf32, #tpu.memory_space<vmem>>, vector<2x32xf32>,
    %90 = arith.index_cast %c1_i32 : i32 to index
    %c0_54 = arith.constant 0 : index
    %c0_55 = arith.constant 0 : index
    %91 = vector.load %arg11[%90, %c0_54, %c0_55] : memref<8x2x32xf32, #tpu.memory_space<vmem>>, vector<1x2x32xf32>
    %92 = vector.shape_cast %91 : vector<1x2x32xf32> to vector<2x32xf32>
    %93 = vector.shape_cast %87 : vector<2x32xf32> to vector<1x2x32xf32>
    tpu.vector_store %arg11[%90, %c0_54, %c0_55], %93 {strides = array<i32>} : memref<8x2x32xf32, #tpu.memory_space<vmem>>, vector<1x2x32xf32>,
    %c2_i32 = arith.constant 2 : i32
    %c0_56 = arith.constant 0 : index
    %c0_57 = arith.constant 0 : index
    %94 = vector.load %arg12[%c0_56, %c0_57] : memref<2x32xf32, #tpu.memory_space<vmem>>, vector<2x32xf32>
    %c0_58 = arith.constant 0 : index
    %c0_59 = arith.constant 0 : index
    %95 = vector.load %arg13[%c0_58, %c0_59] : memref<2x32xf32, #tpu.memory_space<vmem>>, vector<2x32xf32>
    %96 = arith.index_cast %c2_i32 : i32 to index
    %c0_60 = arith.constant 0 : index
    %c0_61 = arith.constant 0 : index
    %97 = vector.load %arg10[%96, %c0_60, %c0_61] : memref<8x2x128xf32, #tpu.memory_space<vmem>>, vector<1x2x128xf32>
    %98 = vector.shape_cast %97 : vector<1x2x128xf32> to vector<2x128xf32>
    %c0_62 = arith.constant 0 : index
    %c0_63 = arith.constant 0 : index
    %99 = vector.load %arg6[%c0_62, %c0_63] : memref<32x128xf32, #tpu.memory_space<vmem>>, vector<32x128xf32>
    %cst_64 = arith.constant dense<0.000000e+00> : vector<2x128xf32>
    %100 = tpu.matmul %94, %99, %cst_64 {dimension_numbers = #tpu.dot_dimension_numbers<[1], [0], [0], [1], [0, 0, 1, 1], [], []>} : vector<2x32xf32>, vector<32x128xf32>, vector<2x128xf32> -> vector<2x128xf32>
    %101 = arith.addf %98, %100 : vector<2x128xf32>
    %102 = vector.extract_strided_slice %101 {offsets = [0, 0], sizes = [2, 32], strides = [1, 1]} : vector<2x128xf32> to vector<2x32xf32>
    %103 = arith.negf %102 : vector<2x32xf32>
    %104 = math.exp %103 : vector<2x32xf32>
    %cst_65 = arith.constant 1.000000e+00 : f32
    %105 = vector.broadcast %cst_65 : f32 to vector<2x32xf32>
    %106 = arith.addf %105, %104 : vector<2x32xf32>
    %107 = arith.divf %105, %106 : vector<2x32xf32>
    %108 = vector.extract_strided_slice %101 {offsets = [0, 32], sizes = [2, 32], strides = [1, 1]} : vector<2x128xf32> to vector<2x32xf32>
    %109 = arith.negf %108 : vector<2x32xf32>
    %110 = math.exp %109 : vector<2x32xf32>
    %cst_66 = arith.constant 1.000000e+00 : f32
    %111 = vector.broadcast %cst_66 : f32 to vector<2x32xf32>
    %112 = arith.addf %111, %110 : vector<2x32xf32>
    %113 = arith.divf %111, %112 : vector<2x32xf32>
    %114 = vector.extract_strided_slice %101 {offsets = [0, 64], sizes = [2, 32], strides = [1, 1]} : vector<2x128xf32> to vector<2x32xf32>
    %115 = math.tanh %114 : vector<2x32xf32>
    %116 = vector.extract_strided_slice %101 {offsets = [0, 96], sizes = [2, 32], strides = [1, 1]} : vector<2x128xf32> to vector<2x32xf32>
    %117 = arith.negf %116 : vector<2x32xf32>
    %118 = math.exp %117 : vector<2x32xf32>
    %cst_67 = arith.constant 1.000000e+00 : f32
    %119 = vector.broadcast %cst_67 : f32 to vector<2x32xf32>
    %120 = arith.addf %119, %118 : vector<2x32xf32>
    %121 = arith.divf %119, %120 : vector<2x32xf32>
    %122 = arith.mulf %113, %95 : vector<2x32xf32>
    %123 = arith.mulf %107, %115 : vector<2x32xf32>
    %124 = arith.addf %122, %123 : vector<2x32xf32>
    %125 = math.tanh %124 : vector<2x32xf32>
    %126 = arith.mulf %121, %125 : vector<2x32xf32>
    %c0_68 = arith.constant 0 : index
    %c0_69 = arith.constant 0 : index
    %127 = vector.load %arg12[%c0_68, %c0_69] : memref<2x32xf32, #tpu.memory_space<vmem>>, vector<2x32xf32>
    tpu.vector_store %arg12[%c0_68, %c0_69], %126 {strides = array<i32>} : memref<2x32xf32, #tpu.memory_space<vmem>>, vector<2x32xf32>,
    %c0_70 = arith.constant 0 : index
    %c0_71 = arith.constant 0 : index
    %128 = vector.load %arg13[%c0_70, %c0_71] : memref<2x32xf32, #tpu.memory_space<vmem>>, vector<2x32xf32>
    tpu.vector_store %arg13[%c0_70, %c0_71], %124 {strides = array<i32>} : memref<2x32xf32, #tpu.memory_space<vmem>>, vector<2x32xf32>,
    %129 = arith.index_cast %c2_i32 : i32 to index
    %c0_72 = arith.constant 0 : index
    %c0_73 = arith.constant 0 : index
    %130 = vector.load %arg11[%129, %c0_72, %c0_73] : memref<8x2x32xf32, #tpu.memory_space<vmem>>, vector<1x2x32xf32>
    %131 = vector.shape_cast %130 : vector<1x2x32xf32> to vector<2x32xf32>
    %132 = vector.shape_cast %126 : vector<2x32xf32> to vector<1x2x32xf32>
    tpu.vector_store %arg11[%129, %c0_72, %c0_73], %132 {strides = array<i32>} : memref<8x2x32xf32, #tpu.memory_space<vmem>>, vector<1x2x32xf32>,
    %c3_i32 = arith.constant 3 : i32
    %c0_74 = arith.constant 0 : index
    %c0_75 = arith.constant 0 : index
    %133 = vector.load %arg12[%c0_74, %c0_75] : memref<2x32xf32, #tpu.memory_space<vmem>>, vector<2x32xf32>
    %c0_76 = arith.constant 0 : index
    %c0_77 = arith.constant 0 : index
    %134 = vector.load %arg13[%c0_76, %c0_77] : memref<2x32xf32, #tpu.memory_space<vmem>>, vector<2x32xf32>
    %135 = arith.index_cast %c3_i32 : i32 to index
    %c0_78 = arith.constant 0 : index
    %c0_79 = arith.constant 0 : index
    %136 = vector.load %arg10[%135, %c0_78, %c0_79] : memref<8x2x128xf32, #tpu.memory_space<vmem>>, vector<1x2x128xf32>
    %137 = vector.shape_cast %136 : vector<1x2x128xf32> to vector<2x128xf32>
    %c0_80 = arith.constant 0 : index
    %c0_81 = arith.constant 0 : index
    %138 = vector.load %arg6[%c0_80, %c0_81] : memref<32x128xf32, #tpu.memory_space<vmem>>, vector<32x128xf32>
    %cst_82 = arith.constant dense<0.000000e+00> : vector<2x128xf32>
    %139 = tpu.matmul %133, %138, %cst_82 {dimension_numbers = #tpu.dot_dimension_numbers<[1], [0], [0], [1], [0, 0, 1, 1], [], []>} : vector<2x32xf32>, vector<32x128xf32>, vector<2x128xf32> -> vector<2x128xf32>
    %140 = arith.addf %137, %139 : vector<2x128xf32>
    %141 = vector.extract_strided_slice %140 {offsets = [0, 0], sizes = [2, 32], strides = [1, 1]} : vector<2x128xf32> to vector<2x32xf32>
    %142 = arith.negf %141 : vector<2x32xf32>
    %143 = math.exp %142 : vector<2x32xf32>
    %cst_83 = arith.constant 1.000000e+00 : f32
    %144 = vector.broadcast %cst_83 : f32 to vector<2x32xf32>
    %145 = arith.addf %144, %143 : vector<2x32xf32>
    %146 = arith.divf %144, %145 : vector<2x32xf32>
    %147 = vector.extract_strided_slice %140 {offsets = [0, 32], sizes = [2, 32], strides = [1, 1]} : vector<2x128xf32> to vector<2x32xf32>
    %148 = arith.negf %147 : vector<2x32xf32>
    %149 = math.exp %148 : vector<2x32xf32>
    %cst_84 = arith.constant 1.000000e+00 : f32
    %150 = vector.broadcast %cst_84 : f32 to vector<2x32xf32>
    %151 = arith.addf %150, %149 : vector<2x32xf32>
    %152 = arith.divf %150, %151 : vector<2x32xf32>
    %153 = vector.extract_strided_slice %140 {offsets = [0, 64], sizes = [2, 32], strides = [1, 1]} : vector<2x128xf32> to vector<2x32xf32>
    %154 = math.tanh %153 : vector<2x32xf32>
    %155 = vector.extract_strided_slice %140 {offsets = [0, 96], sizes = [2, 32], strides = [1, 1]} : vector<2x128xf32> to vector<2x32xf32>
    %156 = arith.negf %155 : vector<2x32xf32>
    %157 = math.exp %156 : vector<2x32xf32>
    %cst_85 = arith.constant 1.000000e+00 : f32
    %158 = vector.broadcast %cst_85 : f32 to vector<2x32xf32>
    %159 = arith.addf %158, %157 : vector<2x32xf32>
    %160 = arith.divf %158, %159 : vector<2x32xf32>
    %161 = arith.mulf %152, %134 : vector<2x32xf32>
    %162 = arith.mulf %146, %154 : vector<2x32xf32>
    %163 = arith.addf %161, %162 : vector<2x32xf32>
    %164 = math.tanh %163 : vector<2x32xf32>
    %165 = arith.mulf %160, %164 : vector<2x32xf32>
    %c0_86 = arith.constant 0 : index
    %c0_87 = arith.constant 0 : index
    %166 = vector.load %arg12[%c0_86, %c0_87] : memref<2x32xf32, #tpu.memory_space<vmem>>, vector<2x32xf32>
    tpu.vector_store %arg12[%c0_86, %c0_87], %165 {strides = array<i32>} : memref<2x32xf32, #tpu.memory_space<vmem>>, vector<2x32xf32>,
    %c0_88 = arith.constant 0 : index
    %c0_89 = arith.constant 0 : index
    %167 = vector.load %arg13[%c0_88, %c0_89] : memref<2x32xf32, #tpu.memory_space<vmem>>, vector<2x32xf32>
    tpu.vector_store %arg13[%c0_88, %c0_89], %163 {strides = array<i32>} : memref<2x32xf32, #tpu.memory_space<vmem>>, vector<2x32xf32>,
    %168 = arith.index_cast %c3_i32 : i32 to index
    %c0_90 = arith.constant 0 : index
    %c0_91 = arith.constant 0 : index
    %169 = vector.load %arg11[%168, %c0_90, %c0_91] : memref<8x2x32xf32, #tpu.memory_space<vmem>>, vector<1x2x32xf32>
    %170 = vector.shape_cast %169 : vector<1x2x32xf32> to vector<2x32xf32>
    %171 = vector.shape_cast %165 : vector<2x32xf32> to vector<1x2x32xf32>
    tpu.vector_store %arg11[%168, %c0_90, %c0_91], %171 {strides = array<i32>} : memref<8x2x32xf32, #tpu.memory_space<vmem>>, vector<1x2x32xf32>,
    %c4_i32 = arith.constant 4 : i32
    %c0_92 = arith.constant 0 : index
    %c0_93 = arith.constant 0 : index
    %172 = vector.load %arg12[%c0_92, %c0_93] : memref<2x32xf32, #tpu.memory_space<vmem>>, vector<2x32xf32>
    %c0_94 = arith.constant 0 : index
    %c0_95 = arith.constant 0 : index
    %173 = vector.load %arg13[%c0_94, %c0_95] : memref<2x32xf32, #tpu.memory_space<vmem>>, vector<2x32xf32>
    %174 = arith.index_cast %c4_i32 : i32 to index
    %c0_96 = arith.constant 0 : index
    %c0_97 = arith.constant 0 : index
    %175 = vector.load %arg10[%174, %c0_96, %c0_97] : memref<8x2x128xf32, #tpu.memory_space<vmem>>, vector<1x2x128xf32>
    %176 = vector.shape_cast %175 : vector<1x2x128xf32> to vector<2x128xf32>
    %c0_98 = arith.constant 0 : index
    %c0_99 = arith.constant 0 : index
    %177 = vector.load %arg6[%c0_98, %c0_99] : memref<32x128xf32, #tpu.memory_space<vmem>>, vector<32x128xf32>
    %cst_100 = arith.constant dense<0.000000e+00> : vector<2x128xf32>
    %178 = tpu.matmul %172, %177, %cst_100 {dimension_numbers = #tpu.dot_dimension_numbers<[1], [0], [0], [1], [0, 0, 1, 1], [], []>} : vector<2x32xf32>, vector<32x128xf32>, vector<2x128xf32> -> vector<2x128xf32>
    %179 = arith.addf %176, %178 : vector<2x128xf32>
    %180 = vector.extract_strided_slice %179 {offsets = [0, 0], sizes = [2, 32], strides = [1, 1]} : vector<2x128xf32> to vector<2x32xf32>
    %181 = arith.negf %180 : vector<2x32xf32>
    %182 = math.exp %181 : vector<2x32xf32>
    %cst_101 = arith.constant 1.000000e+00 : f32
    %183 = vector.broadcast %cst_101 : f32 to vector<2x32xf32>
    %184 = arith.addf %183, %182 : vector<2x32xf32>
    %185 = arith.divf %183, %184 : vector<2x32xf32>
    %186 = vector.extract_strided_slice %179 {offsets = [0, 32], sizes = [2, 32], strides = [1, 1]} : vector<2x128xf32> to vector<2x32xf32>
    %187 = arith.negf %186 : vector<2x32xf32>
    %188 = math.exp %187 : vector<2x32xf32>
    %cst_102 = arith.constant 1.000000e+00 : f32
    %189 = vector.broadcast %cst_102 : f32 to vector<2x32xf32>
    %190 = arith.addf %189, %188 : vector<2x32xf32>
    %191 = arith.divf %189, %190 : vector<2x32xf32>
    %192 = vector.extract_strided_slice %179 {offsets = [0, 64], sizes = [2, 32], strides = [1, 1]} : vector<2x128xf32> to vector<2x32xf32>
    %193 = math.tanh %192 : vector<2x32xf32>
    %194 = vector.extract_strided_slice %179 {offsets = [0, 96], sizes = [2, 32], strides = [1, 1]} : vector<2x128xf32> to vector<2x32xf32>
    %195 = arith.negf %194 : vector<2x32xf32>
    %196 = math.exp %195 : vector<2x32xf32>
    %cst_103 = arith.constant 1.000000e+00 : f32
    %197 = vector.broadcast %cst_103 : f32 to vector<2x32xf32>
    %198 = arith.addf %197, %196 : vector<2x32xf32>
    %199 = arith.divf %197, %198 : vector<2x32xf32>
    %200 = arith.mulf %191, %173 : vector<2x32xf32>
    %201 = arith.mulf %185, %193 : vector<2x32xf32>
    %202 = arith.addf %200, %201 : vector<2x32xf32>
    %203 = math.tanh %202 : vector<2x32xf32>
    %204 = arith.mulf %199, %203 : vector<2x32xf32>
    %c0_104 = arith.constant 0 : index
    %c0_105 = arith.constant 0 : index
    %205 = vector.load %arg12[%c0_104, %c0_105] : memref<2x32xf32, #tpu.memory_space<vmem>>, vector<2x32xf32>
    tpu.vector_store %arg12[%c0_104, %c0_105], %204 {strides = array<i32>} : memref<2x32xf32, #tpu.memory_space<vmem>>, vector<2x32xf32>,
    %c0_106 = arith.constant 0 : index
    %c0_107 = arith.constant 0 : index
    %206 = vector.load %arg13[%c0_106, %c0_107] : memref<2x32xf32, #tpu.memory_space<vmem>>, vector<2x32xf32>
    tpu.vector_store %arg13[%c0_106, %c0_107], %202 {strides = array<i32>} : memref<2x32xf32, #tpu.memory_space<vmem>>, vector<2x32xf32>,
    %207 = arith.index_cast %c4_i32 : i32 to index
    %c0_108 = arith.constant 0 : index
    %c0_109 = arith.constant 0 : index
    %208 = vector.load %arg11[%207, %c0_108, %c0_109] : memref<8x2x32xf32, #tpu.memory_space<vmem>>, vector<1x2x32xf32>
    %209 = vector.shape_cast %208 : vector<1x2x32xf32> to vector<2x32xf32>
    %210 = vector.shape_cast %204 : vector<2x32xf32> to vector<1x2x32xf32>
    tpu.vector_store %arg11[%207, %c0_108, %c0_109], %210 {strides = array<i32>} : memref<8x2x32xf32, #tpu.memory_space<vmem>>, vector<1x2x32xf32>,
    %c5_i32 = arith.constant 5 : i32
    %c0_110 = arith.constant 0 : index
    %c0_111 = arith.constant 0 : index
    %211 = vector.load %arg12[%c0_110, %c0_111] : memref<2x32xf32, #tpu.memory_space<vmem>>, vector<2x32xf32>
    %c0_112 = arith.constant 0 : index
    %c0_113 = arith.constant 0 : index
    %212 = vector.load %arg13[%c0_112, %c0_113] : memref<2x32xf32, #tpu.memory_space<vmem>>, vector<2x32xf32>
    %213 = arith.index_cast %c5_i32 : i32 to index
    %c0_114 = arith.constant 0 : index
    %c0_115 = arith.constant 0 : index
    %214 = vector.load %arg10[%213, %c0_114, %c0_115] : memref<8x2x128xf32, #tpu.memory_space<vmem>>, vector<1x2x128xf32>
    %215 = vector.shape_cast %214 : vector<1x2x128xf32> to vector<2x128xf32>
    %c0_116 = arith.constant 0 : index
    %c0_117 = arith.constant 0 : index
    %216 = vector.load %arg6[%c0_116, %c0_117] : memref<32x128xf32, #tpu.memory_space<vmem>>, vector<32x128xf32>
    %cst_118 = arith.constant dense<0.000000e+00> : vector<2x128xf32>
    %217 = tpu.matmul %211, %216, %cst_118 {dimension_numbers = #tpu.dot_dimension_numbers<[1], [0], [0], [1], [0, 0, 1, 1], [], []>} : vector<2x32xf32>, vector<32x128xf32>, vector<2x128xf32> -> vector<2x128xf32>
    %218 = arith.addf %215, %217 : vector<2x128xf32>
    %219 = vector.extract_strided_slice %218 {offsets = [0, 0], sizes = [2, 32], strides = [1, 1]} : vector<2x128xf32> to vector<2x32xf32>
    %220 = arith.negf %219 : vector<2x32xf32>
    %221 = math.exp %220 : vector<2x32xf32>
    %cst_119 = arith.constant 1.000000e+00 : f32
    %222 = vector.broadcast %cst_119 : f32 to vector<2x32xf32>
    %223 = arith.addf %222, %221 : vector<2x32xf32>
    %224 = arith.divf %222, %223 : vector<2x32xf32>
    %225 = vector.extract_strided_slice %218 {offsets = [0, 32], sizes = [2, 32], strides = [1, 1]} : vector<2x128xf32> to vector<2x32xf32>
    %226 = arith.negf %225 : vector<2x32xf32>
    %227 = math.exp %226 : vector<2x32xf32>
    %cst_120 = arith.constant 1.000000e+00 : f32
    %228 = vector.broadcast %cst_120 : f32 to vector<2x32xf32>
    %229 = arith.addf %228, %227 : vector<2x32xf32>
    %230 = arith.divf %228, %229 : vector<2x32xf32>
    %231 = vector.extract_strided_slice %218 {offsets = [0, 64], sizes = [2, 32], strides = [1, 1]} : vector<2x128xf32> to vector<2x32xf32>
    %232 = math.tanh %231 : vector<2x32xf32>
    %233 = vector.extract_strided_slice %218 {offsets = [0, 96], sizes = [2, 32], strides = [1, 1]} : vector<2x128xf32> to vector<2x32xf32>
    %234 = arith.negf %233 : vector<2x32xf32>
    %235 = math.exp %234 : vector<2x32xf32>
    %cst_121 = arith.constant 1.000000e+00 : f32
    %236 = vector.broadcast %cst_121 : f32 to vector<2x32xf32>
    %237 = arith.addf %236, %235 : vector<2x32xf32>
    %238 = arith.divf %236, %237 : vector<2x32xf32>
    %239 = arith.mulf %230, %212 : vector<2x32xf32>
    %240 = arith.mulf %224, %232 : vector<2x32xf32>
    %241 = arith.addf %239, %240 : vector<2x32xf32>
    %242 = math.tanh %241 : vector<2x32xf32>
    %243 = arith.mulf %238, %242 : vector<2x32xf32>
    %c0_122 = arith.constant 0 : index
    %c0_123 = arith.constant 0 : index
    %244 = vector.load %arg12[%c0_122, %c0_123] : memref<2x32xf32, #tpu.memory_space<vmem>>, vector<2x32xf32>
    tpu.vector_store %arg12[%c0_122, %c0_123], %243 {strides = array<i32>} : memref<2x32xf32, #tpu.memory_space<vmem>>, vector<2x32xf32>,
    %c0_124 = arith.constant 0 : index
    %c0_125 = arith.constant 0 : index
    %245 = vector.load %arg13[%c0_124, %c0_125] : memref<2x32xf32, #tpu.memory_space<vmem>>, vector<2x32xf32>
    tpu.vector_store %arg13[%c0_124, %c0_125], %241 {strides = array<i32>} : memref<2x32xf32, #tpu.memory_space<vmem>>, vector<2x32xf32>,
    %246 = arith.index_cast %c5_i32 : i32 to index
    %c0_126 = arith.constant 0 : index
    %c0_127 = arith.constant 0 : index
    %247 = vector.load %arg11[%246, %c0_126, %c0_127] : memref<8x2x32xf32, #tpu.memory_space<vmem>>, vector<1x2x32xf32>
    %248 = vector.shape_cast %247 : vector<1x2x32xf32> to vector<2x32xf32>
    %249 = vector.shape_cast %243 : vector<2x32xf32> to vector<1x2x32xf32>
    tpu.vector_store %arg11[%246, %c0_126, %c0_127], %249 {strides = array<i32>} : memref<8x2x32xf32, #tpu.memory_space<vmem>>, vector<1x2x32xf32>,
    %c6_i32 = arith.constant 6 : i32
    %c0_128 = arith.constant 0 : index
    %c0_129 = arith.constant 0 : index
    %250 = vector.load %arg12[%c0_128, %c0_129] : memref<2x32xf32, #tpu.memory_space<vmem>>, vector<2x32xf32>
    %c0_130 = arith.constant 0 : index
    %c0_131 = arith.constant 0 : index
    %251 = vector.load %arg13[%c0_130, %c0_131] : memref<2x32xf32, #tpu.memory_space<vmem>>, vector<2x32xf32>
    %252 = arith.index_cast %c6_i32 : i32 to index
    %c0_132 = arith.constant 0 : index
    %c0_133 = arith.constant 0 : index
    %253 = vector.load %arg10[%252, %c0_132, %c0_133] : memref<8x2x128xf32, #tpu.memory_space<vmem>>, vector<1x2x128xf32>
    %254 = vector.shape_cast %253 : vector<1x2x128xf32> to vector<2x128xf32>
    %c0_134 = arith.constant 0 : index
    %c0_135 = arith.constant 0 : index
    %255 = vector.load %arg6[%c0_134, %c0_135] : memref<32x128xf32, #tpu.memory_space<vmem>>, vector<32x128xf32>
    %cst_136 = arith.constant dense<0.000000e+00> : vector<2x128xf32>
    %256 = tpu.matmul %250, %255, %cst_136 {dimension_numbers = #tpu.dot_dimension_numbers<[1], [0], [0], [1], [0, 0, 1, 1], [], []>} : vector<2x32xf32>, vector<32x128xf32>, vector<2x128xf32> -> vector<2x128xf32>
    %257 = arith.addf %254, %256 : vector<2x128xf32>
    %258 = vector.extract_strided_slice %257 {offsets = [0, 0], sizes = [2, 32], strides = [1, 1]} : vector<2x128xf32> to vector<2x32xf32>
    %259 = arith.negf %258 : vector<2x32xf32>
    %260 = math.exp %259 : vector<2x32xf32>
    %cst_137 = arith.constant 1.000000e+00 : f32
    %261 = vector.broadcast %cst_137 : f32 to vector<2x32xf32>
    %262 = arith.addf %261, %260 : vector<2x32xf32>
    %263 = arith.divf %261, %262 : vector<2x32xf32>
    %264 = vector.extract_strided_slice %257 {offsets = [0, 32], sizes = [2, 32], strides = [1, 1]} : vector<2x128xf32> to vector<2x32xf32>
    %265 = arith.negf %264 : vector<2x32xf32>
    %266 = math.exp %265 : vector<2x32xf32>
    %cst_138 = arith.constant 1.000000e+00 : f32
    %267 = vector.broadcast %cst_138 : f32 to vector<2x32xf32>
    %268 = arith.addf %267, %266 : vector<2x32xf32>
    %269 = arith.divf %267, %268 : vector<2x32xf32>
    %270 = vector.extract_strided_slice %257 {offsets = [0, 64], sizes = [2, 32], strides = [1, 1]} : vector<2x128xf32> to vector<2x32xf32>
    %271 = math.tanh %270 : vector<2x32xf32>
    %272 = vector.extract_strided_slice %257 {offsets = [0, 96], sizes = [2, 32], strides = [1, 1]} : vector<2x128xf32> to vector<2x32xf32>
    %273 = arith.negf %272 : vector<2x32xf32>
    %274 = math.exp %273 : vector<2x32xf32>
    %cst_139 = arith.constant 1.000000e+00 : f32
    %275 = vector.broadcast %cst_139 : f32 to vector<2x32xf32>
    %276 = arith.addf %275, %274 : vector<2x32xf32>
    %277 = arith.divf %275, %276 : vector<2x32xf32>
    %278 = arith.mulf %269, %251 : vector<2x32xf32>
    %279 = arith.mulf %263, %271 : vector<2x32xf32>
    %280 = arith.addf %278, %279 : vector<2x32xf32>
    %281 = math.tanh %280 : vector<2x32xf32>
    %282 = arith.mulf %277, %281 : vector<2x32xf32>
    %c0_140 = arith.constant 0 : index
    %c0_141 = arith.constant 0 : index
    %283 = vector.load %arg12[%c0_140, %c0_141] : memref<2x32xf32, #tpu.memory_space<vmem>>, vector<2x32xf32>
    tpu.vector_store %arg12[%c0_140, %c0_141], %282 {strides = array<i32>} : memref<2x32xf32, #tpu.memory_space<vmem>>, vector<2x32xf32>,
    %c0_142 = arith.constant 0 : index
    %c0_143 = arith.constant 0 : index
    %284 = vector.load %arg13[%c0_142, %c0_143] : memref<2x32xf32, #tpu.memory_space<vmem>>, vector<2x32xf32>
    tpu.vector_store %arg13[%c0_142, %c0_143], %280 {strides = array<i32>} : memref<2x32xf32, #tpu.memory_space<vmem>>, vector<2x32xf32>,
    %285 = arith.index_cast %c6_i32 : i32 to index
    %c0_144 = arith.constant 0 : index
    %c0_145 = arith.constant 0 : index
    %286 = vector.load %arg11[%285, %c0_144, %c0_145] : memref<8x2x32xf32, #tpu.memory_space<vmem>>, vector<1x2x32xf32>
    %287 = vector.shape_cast %286 : vector<1x2x32xf32> to vector<2x32xf32>
    %288 = vector.shape_cast %282 : vector<2x32xf32> to vector<1x2x32xf32>
    tpu.vector_store %arg11[%285, %c0_144, %c0_145], %288 {strides = array<i32>} : memref<8x2x32xf32, #tpu.memory_space<vmem>>, vector<1x2x32xf32>,
    %c7_i32 = arith.constant 7 : i32
    %c0_146 = arith.constant 0 : index
    %c0_147 = arith.constant 0 : index
    %289 = vector.load %arg12[%c0_146, %c0_147] : memref<2x32xf32, #tpu.memory_space<vmem>>, vector<2x32xf32>
    %c0_148 = arith.constant 0 : index
    %c0_149 = arith.constant 0 : index
    %290 = vector.load %arg13[%c0_148, %c0_149] : memref<2x32xf32, #tpu.memory_space<vmem>>, vector<2x32xf32>
    %291 = arith.index_cast %c7_i32 : i32 to index
    %c0_150 = arith.constant 0 : index
    %c0_151 = arith.constant 0 : index
    %292 = vector.load %arg10[%291, %c0_150, %c0_151] : memref<8x2x128xf32, #tpu.memory_space<vmem>>, vector<1x2x128xf32>
    %293 = vector.shape_cast %292 : vector<1x2x128xf32> to vector<2x128xf32>
    %c0_152 = arith.constant 0 : index
    %c0_153 = arith.constant 0 : index
    %294 = vector.load %arg6[%c0_152, %c0_153] : memref<32x128xf32, #tpu.memory_space<vmem>>, vector<32x128xf32>
    %cst_154 = arith.constant dense<0.000000e+00> : vector<2x128xf32>
    %295 = tpu.matmul %289, %294, %cst_154 {dimension_numbers = #tpu.dot_dimension_numbers<[1], [0], [0], [1], [0, 0, 1, 1], [], []>} : vector<2x32xf32>, vector<32x128xf32>, vector<2x128xf32> -> vector<2x128xf32>
    %296 = arith.addf %293, %295 : vector<2x128xf32>
    %297 = vector.extract_strided_slice %296 {offsets = [0, 0], sizes = [2, 32], strides = [1, 1]} : vector<2x128xf32> to vector<2x32xf32>
    %298 = arith.negf %297 : vector<2x32xf32>
    %299 = math.exp %298 : vector<2x32xf32>
    %cst_155 = arith.constant 1.000000e+00 : f32
    %300 = vector.broadcast %cst_155 : f32 to vector<2x32xf32>
    %301 = arith.addf %300, %299 : vector<2x32xf32>
    %302 = arith.divf %300, %301 : vector<2x32xf32>
    %303 = vector.extract_strided_slice %296 {offsets = [0, 32], sizes = [2, 32], strides = [1, 1]} : vector<2x128xf32> to vector<2x32xf32>
    %304 = arith.negf %303 : vector<2x32xf32>
    %305 = math.exp %304 : vector<2x32xf32>
    %cst_156 = arith.constant 1.000000e+00 : f32
    %306 = vector.broadcast %cst_156 : f32 to vector<2x32xf32>
    %307 = arith.addf %306, %305 : vector<2x32xf32>
    %308 = arith.divf %306, %307 : vector<2x32xf32>
    %309 = vector.extract_strided_slice %296 {offsets = [0, 64], sizes = [2, 32], strides = [1, 1]} : vector<2x128xf32> to vector<2x32xf32>
    %310 = math.tanh %309 : vector<2x32xf32>
    %311 = vector.extract_strided_slice %296 {offsets = [0, 96], sizes = [2, 32], strides = [1, 1]} : vector<2x128xf32> to vector<2x32xf32>
    %312 = arith.negf %311 : vector<2x32xf32>
    %313 = math.exp %312 : vector<2x32xf32>
    %cst_157 = arith.constant 1.000000e+00 : f32
    %314 = vector.broadcast %cst_157 : f32 to vector<2x32xf32>
    %315 = arith.addf %314, %313 : vector<2x32xf32>
    %316 = arith.divf %314, %315 : vector<2x32xf32>
    %317 = arith.mulf %308, %290 : vector<2x32xf32>
    %318 = arith.mulf %302, %310 : vector<2x32xf32>
    %319 = arith.addf %317, %318 : vector<2x32xf32>
    %320 = math.tanh %319 : vector<2x32xf32>
    %321 = arith.mulf %316, %320 : vector<2x32xf32>
    %c0_158 = arith.constant 0 : index
    %c0_159 = arith.constant 0 : index
    %322 = vector.load %arg12[%c0_158, %c0_159] : memref<2x32xf32, #tpu.memory_space<vmem>>, vector<2x32xf32>
    tpu.vector_store %arg12[%c0_158, %c0_159], %321 {strides = array<i32>} : memref<2x32xf32, #tpu.memory_space<vmem>>, vector<2x32xf32>,
    %c0_160 = arith.constant 0 : index
    %c0_161 = arith.constant 0 : index
    %323 = vector.load %arg13[%c0_160, %c0_161] : memref<2x32xf32, #tpu.memory_space<vmem>>, vector<2x32xf32>
    tpu.vector_store %arg13[%c0_160, %c0_161], %319 {strides = array<i32>} : memref<2x32xf32, #tpu.memory_space<vmem>>, vector<2x32xf32>,
    %324 = arith.index_cast %c7_i32 : i32 to index
    %c0_162 = arith.constant 0 : index
    %c0_163 = arith.constant 0 : index
    %325 = vector.load %arg11[%324, %c0_162, %c0_163] : memref<8x2x32xf32, #tpu.memory_space<vmem>>, vector<1x2x32xf32>
    %326 = vector.shape_cast %325 : vector<1x2x32xf32> to vector<2x32xf32>
    %327 = vector.shape_cast %321 : vector<2x32xf32> to vector<1x2x32xf32>
    tpu.vector_store %arg11[%324, %c0_162, %c0_163], %327 {strides = array<i32>} : memref<8x2x32xf32, #tpu.memory_space<vmem>>, vector<1x2x32xf32>,
    %c8_i32 = arith.constant 8 : i32
    %c0_164 = arith.constant 0 : index
    %c0_165 = arith.constant 0 : index
    %c0_166 = arith.constant 0 : index
    %328 = vector.load %arg11[%c0_164, %c0_165, %c0_166] : memref<8x2x32xf32, #tpu.memory_space<vmem>>, vector<8x2x32xf32>
    %329 = vector.shape_cast %328 : vector<8x2x32xf32> to vector<16x32xf32>
    %330 = arith.truncf %329 : vector<16x32xf32> to vector<16x32xbf16>
    %c0_167 = arith.constant 0 : index
    %c0_168 = arith.constant 0 : index
    %331 = vector.load %arg7[%c0_167, %c0_168] : memref<32x128xbf16, #tpu.memory_space<vmem>>, vector<32x128xbf16>
    %cst_169 = arith.constant dense<0.000000e+00> : vector<16x128xf32>
    %332 = tpu.matmul %330, %331, %cst_169 {dimension_numbers = #tpu.dot_dimension_numbers<[1], [0], [0], [1], [0, 0, 1, 1], [], []>} : vector<16x32xbf16>, vector<32x128xbf16>, vector<16x128xf32> -> vector<16x128xf32>
    %c0_170 = arith.constant 0 : index
    %c0_171 = arith.constant 0 : index
    %333 = vector.load %arg8[%c0_170, %c0_171] : memref<1x128xf32, #tpu.memory_space<vmem>>, vector<1x128xf32>
    %334 = vector.broadcast %333 : vector<1x128xf32> to vector<16x128xf32>
    %335 = arith.addf %332, %334 : vector<16x128xf32>
    %336 = vector.shape_cast %335 : vector<16x128xf32> to vector<8x2x128xf32>
    %c0_172 = arith.constant 0 : index
    %c0_173 = arith.constant 0 : index
    %c0_174 = arith.constant 0 : index
    %337 = vector.load %arg9[%c0_172, %c0_173, %c0_174] : memref<8x2x128xf32, #tpu.memory_space<vmem>>, vector<8x2x128xf32>
    tpu.vector_store %arg9[%c0_172, %c0_173, %c0_174], %336 {strides = array<i32>} : memref<8x2x128xf32, #tpu.memory_space<vmem>>, vector<8x2x128xf32>,
    return
  }
  func.func @transform_0(%arg0: i32) -> (i32, i32, i32) {
    %c0_i32 = arith.constant 0 : i32
    %c0_i32_0 = arith.constant 0 : i32
    %c0_i32_1 = arith.constant 0 : i32
    return %c0_i32, %arg0, %c0_i32_0 : i32, i32, i32
  }
  func.func @transform_1(%arg0: i32) -> (i32, i32) {
    %c0_i32 = arith.constant 0 : i32
    %c0_i32_0 = arith.constant 0 : i32
    %c0_i32_1 = arith.constant 0 : i32
    return %c0_i32, %c0_i32_0 : i32, i32
  }
  func.func @transform_2(%arg0: i32) -> (i32, i32) {
    %c0_i32 = arith.constant 0 : i32
    %c0_i32_0 = arith.constant 0 : i32
    return %arg0, %c0_i32 : i32, i32
  }
  func.func @transform_3(%arg0: i32) -> (i32, i32) {
    %c0_i32 = arith.constant 0 : i32
    %c0_i32_0 = arith.constant 0 : i32
    %c0_i32_1 = arith.constant 0 : i32
    return %c0_i32, %c0_i32_0 : i32, i32
  }
  func.func @transform_4(%arg0: i32) -> (i32, i32) {
    %c0_i32 = arith.constant 0 : i32
    %c0_i32_0 = arith.constant 0 : i32
    %c0_i32_1 = arith.constant 0 : i32
    return %c0_i32, %c0_i32_0 : i32, i32
  }
  func.func @transform_5(%arg0: i32) -> (i32, i32) {
    %c0_i32 = arith.constant 0 : i32
    %c0_i32_0 = arith.constant 0 : i32
    %c0_i32_1 = arith.constant 0 : i32
    return %c0_i32, %c0_i32_0 : i32, i32
  }
  func.func @transform_6(%arg0: i32) -> (i32, i32) {
    %c0_i32 = arith.constant 0 : i32
    %c0_i32_0 = arith.constant 0 : i32
    %c0_i32_1 = arith.constant 0 : i32
    return %c0_i32, %c0_i32_0 : i32, i32
  }
  func.func @transform_7(%arg0: i32) -> (i32, i32) {
    %c0_i32 = arith.constant 0 : i32
    %c0_i32_0 = arith.constant 0 : i32
    %c0_i32_1 = arith.constant 0 : i32
    return %c0_i32, %c0_i32_0 : i32, i32
  }
  func.func @transform_8(%arg0: i32) -> (i32, i32, i32) {
    %c0_i32 = arith.constant 0 : i32
    %c0_i32_0 = arith.constant 0 : i32
    %c0_i32_1 = arith.constant 0 : i32
    return %c0_i32, %arg0, %c0_i32_0 : i32, i32, i32
  }
}

</mosaic_0001>

<llo_original>
// kernel: tpu_custom_call.1
$region0: #{tpu_custom_call.1}
  #allocation0 [shape = 'u32[]', space=smem, size = 0x4, offset = 0x4, fixed_abs, tag = 'smem constant byte address 0x4 - core index']
  #allocation1 [shape = 'u32[72,128]{1,0:T(1,128)}', space=vmem, size = 0x9000, scoped, tag = 'internal scratch']
  #allocation2 [shape = 'f32[8,2,128]{2,1,0:T(2,128)}', space=vmem, size = 0x2000, scoped, tag = 'scratch operand']
  #allocation3 [shape = 'f32[8,2,32]{2,1,0:T(2,128)}', space=vmem, size = 0x2000, scoped, tag = 'scratch operand']
  #allocation4 [shape = 'f32[2,32]{1,0:T(2,128)}', space=vmem, size = 0x400, scoped, tag = 'scratch operand']
  #allocation5 [shape = 'f32[2,32]{1,0:T(2,128)}', space=vmem, size = 0x400, scoped, tag = 'scratch operand']
  %s0 = inlined_call_operand.vmem [shape: bf16[8,2,128], index: 0, kind: input, shape index: {}]
  %s1 = inlined_call_operand.vmem [shape: bf16[128,32], index: 1, kind: input, shape index: {}]
  %s2 = inlined_call_operand.vmem [shape: f32[2,32], index: 2, kind: input, shape index: {}]
  %s3 = inlined_call_operand.vmem [shape: bf16[32,128], index: 3, kind: input, shape index: {}]
  %s4 = inlined_call_operand.vmem [shape: f32[1,128], index: 4, kind: input, shape index: {}]
  %s5 = inlined_call_operand.vmem [shape: f32[32,128], index: 5, kind: input, shape index: {}]
  %s6 = inlined_call_operand.vmem [shape: bf16[32,128], index: 6, kind: input, shape index: {}]
  %s7 = inlined_call_operand.vmem [shape: f32[1,128], index: 7, kind: input, shape index: {}]
  %s8 = inlined_call_operand.hbm [shape: f32[8,2,128], index: 8, kind: output, shape index: {}]
  %s9 = sld [smem:[#allocation0]]
  $region42: #{tpu_custom_call.1} parent=0
    _
  %s11 = ssub.s32 1, %s9
  %s12 = scalar_select 0, %s11, %s9
  $region1: #{tpu_custom_call.1} parent=0
    #allocation6 [shape = 'u8[8192]{0}', space=vmem, size = 0x2000, scoped, tag = 'output window, operand 0, single buffered']
    #allocation7 [shape = 's32[1]{0}', space=sflag, size = 0x4, scoped, tag = 'scoped memory for tpu_custom_call.1']
    %13 = vsyncpa [#allocation7], 0
    // Predicated region
    $region2: #{tpu_custom_call.1} parent=1 // pred_check
      _
    $region3: #{tpu_custom_call.1} parent=1 // pred_check_branch
      %15 = sbr.rel (0) target = $region5
    $region4: #{tpu_custom_call.1} parent=1 // pred_region
      _
    $region5: #{tpu_custom_call.1} parent=1 // pred_fallthru
      _
    // Predicated region
    $region6: #{tpu_custom_call.1} parent=1 // pred_check
      _
    $region7: #{tpu_custom_call.1} parent=1 // pred_check_branch
      %17 = sbr.rel (0) target = $region9
    $region8: #{tpu_custom_call.1} parent=1 // pred_region
      _
    $region9: #{tpu_custom_call.1} parent=1 // pred_fallthru
      _
    // Predicated region
    $region10: #{tpu_custom_call.1} parent=1 // pred_check
      _
    $region11: #{tpu_custom_call.1} parent=1 // pred_check_branch
      %19 = sbr.rel (0) target = $region13
    $region12: #{tpu_custom_call.1} parent=1 // pred_region
      _
    $region13: #{tpu_custom_call.1} parent=1 // pred_fallthru
      _
    // Predicated region
    $region14: #{tpu_custom_call.1} parent=1 // pred_check
      _
    $region15: #{tpu_custom_call.1} parent=1 // pred_check_branch
      %21 = sbr.rel (0) target = $region17
    $region16: #{tpu_custom_call.1} parent=1 // pred_region
      _
    $region17: #{tpu_custom_call.1} parent=1 // pred_fallthru
      _
    // Predicated region
    $region18: #{tpu_custom_call.1} parent=1 // pred_check
      _
    $region19: #{tpu_custom_call.1} parent=1 // pred_check_branch
      %23 = sbr.rel (0) target = $region21
    $region20: #{tpu_custom_call.1} parent=1 // pred_region
      _
    $region21: #{tpu_custom_call.1} parent=1 // pred_fallthru
      _
    // Predicated region
    $region22: #{tpu_custom_call.1} parent=1 // pred_check
      _
    $region23: #{tpu_custom_call.1} parent=1 // pred_check_branch
      %25 = sbr.rel (0) target = $region25
    $region24: #{tpu_custom_call.1} parent=1 // pred_region
      _
    $region25: #{tpu_custom_call.1} parent=1 // pred_fallthru
      _
    // Predicated region
    $region26: #{tpu_custom_call.1} parent=1 // pred_check
      _
    $region27: #{tpu_custom_call.1} parent=1 // pred_check_branch
      %27 = sbr.rel (0) target = $region29
    $region28: #{tpu_custom_call.1} parent=1 // pred_region
      _
    $region29: #{tpu_custom_call.1} parent=1 // pred_fallthru
      _
    // Predicated region
    $region30: #{tpu_custom_call.1} parent=1 // pred_check
      _
    $region31: #{tpu_custom_call.1} parent=1 // pred_check_branch
      %29 = sbr.rel (0) target = $region33
    $region32: #{tpu_custom_call.1} parent=1 // pred_region
      _
    $region33: #{tpu_custom_call.1} parent=1 // pred_fallthru
      _
    %v31 = vld [vmem:[%s0] sm:$0x1]
    %v32 = vld [vmem:[%s0 + $0x1] sm:$0x1]
    %v33 = vld [vmem:[%s0 + $0x2] sm:$0x1]
    %v34 = vld [vmem:[%s0 + $0x3] sm:$0x1]
    %v35 = vld [vmem:[%s0 + $0x4] sm:$0x1]
    %v36 = vld [vmem:[%s0 + $0x5] sm:$0x1]
    %v37 = vld [vmem:[%s0 + $0x6] sm:$0x1]
    %v38 = vld [vmem:[%s0 + $0x7] sm:$0x1]
    %v39 = vld [vmem:[%s1] sm:$0xf]
    %v40 = vld [vmem:[%s1 + $0x4] sm:$0xf]
    %v41 = vld [vmem:[%s1 + $0x8] sm:$0xf]
    %v42 = vld [vmem:[%s1 + $0xc] sm:$0xf]
    %v43 = vld [vmem:[%s1 + $0x10] sm:$0xf]
    %v44 = vld [vmem:[%s1 + $0x14] sm:$0xf]
    %v45 = vld [vmem:[%s1 + $0x18] sm:$0xf]
    %v46 = vld [vmem:[%s1 + $0x1c] sm:$0xf]
    %v47 = vld [vmem:[%s1 + $0x20] sm:$0xf]
    %v48 = vld [vmem:[%s1 + $0x24] sm:$0xf]
    %v49 = vld [vmem:[%s1 + $0x28] sm:$0xf]
    %v50 = vld [vmem:[%s1 + $0x2c] sm:$0xf]
    %v51 = vld [vmem:[%s1 + $0x30] sm:$0xf]
    %v52 = vld [vmem:[%s1 + $0x34] sm:$0xf]
    %v53 = vld [vmem:[%s1 + $0x38] sm:$0xf]
    %v54 = vld [vmem:[%s1 + $0x3c] sm:$0xf]
    %56 = vst [vmem:[#allocation1] ss:$9 sm:$0xff] %v31
    %s58 = scalar_lea.vmem [#allocation1], 1
    %59 = vst [vmem:[%s58] ss:$9 sm:$0xff] %v32
    %s61 = scalar_lea.vmem [#allocation1], 2
    %62 = vst [vmem:[%s61] ss:$9 sm:$0xff] %v33
    %s64 = scalar_lea.vmem [#allocation1], 3
    %65 = vst [vmem:[%s64] ss:$9 sm:$0xff] %v34
    %s67 = scalar_lea.vmem [#allocation1], 4
    %68 = vst [vmem:[%s67] ss:$9 sm:$0xff] %v35
    %s70 = scalar_lea.vmem [#allocation1], 5
    %71 = vst [vmem:[%s70] ss:$9 sm:$0xff] %v36
    %s73 = scalar_lea.vmem [#allocation1], 6
    %74 = vst [vmem:[%s73] ss:$9 sm:$0xff] %v37
    %s76 = scalar_lea.vmem [#allocation1], 7
    %77 = vst [vmem:[%s76] ss:$9 sm:$0xff] %v38
    %v78 = vld [vmem:[#allocation1] sm:$0xff]
    %v96 = vunpack.c.l.b16 %v39
    %v97 = vunpack.c.l.b16 %v40
    %v98 = vunpack.c.l.b16 %v41
    %v99 = vunpack.c.l.b16 %v42
    %v100 = vunpack.c.l.b16 %v43
    %v101 = vunpack.c.l.b16 %v44
    %v102 = vunpack.c.l.b16 %v45
    %v103 = vunpack.c.l.b16 %v46
    %v104 = vunpack.c.l.b16 %v47
    %v105 = vunpack.c.l.b16 %v48
    %v106 = vunpack.c.l.b16 %v49
    %v107 = vunpack.c.l.b16 %v50
    %v108 = vunpack.c.l.b16 %v51
    %v109 = vunpack.c.l.b16 %v52
    %v110 = vunpack.c.l.b16 %v53
    %v111 = vunpack.c.l.b16 %v54
    %v112 = vpack.c.b16 %v97, %v96
    %v113 = vpack.c.b16 %v99, %v98
    %v114 = vpack.c.b16 %v101, %v100
    %v115 = vpack.c.b16 %v103, %v102
    %v116 = vpack.c.b16 %v105, %v104
    %v117 = vpack.c.b16 %v107, %v106
    %v118 = vpack.c.b16 %v109, %v108
    %v119 = vpack.c.b16 %v111, %v110
    %128 = vmatpush.bf16.msra.mxu0 %v119
    %129 = vmatpush.bf16.msra.mxu0 %v118
    %130 = vmatpush.bf16.msra.mxu0 %v117
    %131 = vmatpush.bf16.msra.mxu0 %v116
    %132 = vmatpush.bf16.msra.mxu0 %v115
    %133 = vmatpush.bf16.msra.mxu0 %v114
    %134 = vmatpush.bf16.msra.mxu0 %v113
    %135 = vmatpush.bf16.msra.mxu0 %v112
    %136 = vmatmul.bf16.gmra.mxu0 %v78
    %v137 = vpop.f32.mrf.mxu0
    %v138 = vadd.f32 0.0, %v137
    %v139 = vpop.f32.mrf.mxu0
    %v140 = vadd.f32 0.0, %v139
    %141 = vdwg.mxu0
    %v142 = vpack.c.bf16 %v140, %v138
    %v143 = vld [vmem:[%s3] sm:$0xf]
    %v144 = vld [vmem:[%s3 + $0x4] sm:$0xf]
    %v145 = vld [vmem:[%s3 + $0x8] sm:$0xf]
    %v146 = vld [vmem:[%s3 + $0xc] sm:$0xf]
    %v147 = vld [vmem:[%s4] sm:$0x1]
    %v149 = vperm.slane %v147, 0
    %v155 = vunpack.c.l.b16 %v143
    %v156 = vunpack.c.l.b16 %v144
    %v157 = vunpack.c.l.b16 %v145
    %v158 = vunpack.c.l.b16 %v146
    %v159 = vpack.c.b16 %v156, %v155
    %v160 = vpack.c.b16 %v158, %v157
    %vm163 = vcmask 261120
    %v165 = vsel %vm163, %v142, 0
    %167 = vmatpush.bf16.msra.mxu0 0
    %168 = vmatpush.bf16.msra.mxu0 0
    %169 = vmatpush.bf16.msra.mxu0 0
    %170 = vmatpush.bf16.msra.mxu0 0
    %171 = vmatpush.bf16.msra.mxu0 0
    %172 = vmatpush.bf16.msra.mxu0 0
    %173 = vmatpush.bf16.msra.mxu0 %v160
    %174 = vmatpush.bf16.msra.mxu0 %v159
    %175 = vmatmul.bf16.gmra.mxu0 %v165
    %v176 = vpop.f32.mrf.mxu0
    %v177 = vadd.f32 %v149, %v176
    %v178 = vpop.f32.mrf.mxu0
    %v179 = vadd.f32 %v149, %v178
    %180 = vdwg.mxu0
    %v183 = vrot.slane %v177, 2
    %v184 = vrot.slane %v177, 4
    %v185 = vrot.slane %v177, 6
    %v186 = vrot.slane %v179, 2
    %v187 = vrot.slane %v179, 4
    %v188 = vrot.slane %v179, 6
    %195 = vst [vmem:[#allocation2] sm:$0x3] %v177
    %196 = vst [vmem:[#allocation2 + $0x2] sm:$0x3] %v183
    %197 = vst [vmem:[#allocation2 + $0x4] sm:$0x3] %v184
    %198 = vst [vmem:[#allocation2 + $0x6] sm:$0x3] %v185
    %199 = vst [vmem:[#allocation2 + $0x8] sm:$0x3] %v179
    %200 = vst [vmem:[#allocation2 + $0xa] sm:$0x3] %v186
    %201 = vst [vmem:[#allocation2 + $0xc] sm:$0x3] %v187
    %202 = vst [vmem:[#allocation2 + $0xe] sm:$0x3] %v188
    %v203 = vld [vmem:[%s2] sm:$0x3]
    %vm204 = vcmask 254976
    %205 = vst.msk [vmem:[#allocation4] sm:$0x3] %vm204, %v203
    %v206 = vld [vmem:[%s2] sm:$0x3]
    %207 = vst.msk [vmem:[#allocation5] sm:$0x3] %vm204, %v206
    %v208 = vld [vmem:[#allocation4] sm:$0x3]
    %v209 = vld [vmem:[#allocation5] sm:$0x3]
    %v210 = vld [vmem:[#allocation2] sm:$0x3]
    %v211 = vld [vmem:[%s5] sm:$0xff]
    %v212 = vld [vmem:[%s5 + $0x8] sm:$0xff]
    %v213 = vld [vmem:[%s5 + $0x10] sm:$0xff]
    %v214 = vld [vmem:[%s5 + $0x18] sm:$0xff]
    %v216 = vsel %vm163, %v208, 0
    %218 = vmatpush.msra.mxu0 0.0
    %219 = vmatpush.msra.mxu0 0.0
    %220 = vmatpush.msra.mxu0 0.0
    %221 = vmatpush.msra.mxu0 0.0
    %222 = vmatpush.msra.mxu0 0.0
    %223 = vmatpush.msra.mxu0 0.0
    %224 = vmatpush.msra.mxu0 0.0
    %225 = vmatpush.msra.mxu0 0.0
    %226 = vmatpush.msra.mxu0 0.0
    %227 = vmatpush.msra.mxu0 0.0
    %228 = vmatpush.msra.mxu0 0.0
    %229 = vmatpush.msra.mxu0 0.0
    %230 = vmatpush.msra.mxu0 %v214
    %231 = vmatpush.msra.mxu0 %v213
    %232 = vmatpush.msra.mxu0 %v212
    %233 = vmatpush.msra.mxu0 %v211
    %234 = vmatmul.f32.gmra.mxu0 %v216
    %v235 = vpop.f32.mrf.mxu0
    %v236 = vadd.f32 0.0, %v235
    %237 = vdwg.mxu0
    %v238 = vadd.f32 %v210, %v236
    %v239 = vxor.u32 %v238, 2147483648
    %v240 = vmul.f32 %v239, 1.442695
    %v241 = vpow.pop %v240
    %v242 = vadd.f32 %v241, 1.0
    %v243 = vrcp.pop %v242
    %v244 = vmul.f32 %v242, %v243
    %v245 = vsub.f32 1.0, %v244
    %v246 = vmul.f32 %v243, %v245
    %v247 = vadd.f32 %v243, %v246
    %vm248 = vweird.f32 %v242
    %vm249 = vweird.f32 %v243
    %vm250 = vmor %vm248, %vm249
    %v251 = vsel %vm250, %v243, %v247
    %v252 = vand.u32 2147483647, %v242
    %vm253 = vcmp.eq.f32.partialorder %v252, 8.507059e+37
    %v254 = vand.u32 %v242, 2147483648
    %v255 = vor.u32 1.1754944e-38, %v254
    %v256 = vsel %vm253, %v255, %v251
    %v257 = vmul.f32 1.0, %v256
    %v258 = vtanh.pop %v238
    %260 = vrot.lane.b32.xlu0 %v209, 32
    %v261 = vpop.permute.xlu0 %260
    %v263 = vmul.f32 %v257, %v261
    %265 = vrot.lane.b32.xlu0 %v258, 64
    %v266 = vpop.permute.xlu0 %265
    %v268 = vmul.f32 %v257, %v266
    %270 = vrot.lane.b32.xlu0 %v268, 32
    %v271 = vpop.permute.xlu0 %270
    %v273 = vadd.f32 %v263, %v271
    %v274 = vtanh.pop %v273
    %276 = vrot.lane.b32.xlu0 %v274, 64
    %v277 = vpop.permute.xlu0 %276
    %v279 = vmul.f32 %v257, %v277
    %281 = vrot.lane.b32.xlu0 %v279, 32
    %v282 = vpop.permute.xlu0 %281
    %284 = vst.msk [vmem:[#allocation4] sm:$0x3] %vm204, %v282
    %286 = vrot.lane.b32.xlu0 %v273, 96
    %v287 = vpop.permute.xlu0 %286
    %289 = vst.msk [vmem:[#allocation5] sm:$0x3] %vm204, %v287
    %290 = vst.msk [vmem:[#allocation3] sm:$0x3] %vm204, %v282
    %v291 = vld [vmem:[#allocation4] sm:$0x3]
    %v292 = vld [vmem:[#allocation5] sm:$0x3]
    %s293 = scalar_lea.vmem [#allocation2], 2
    %v294 = vld [vmem:[%s293] sm:$0x3]
    %v295 = vld [vmem:[%s5] sm:$0xff]
    %v296 = vld [vmem:[%s5 + $0x8] sm:$0xff]
    %v297 = vld [vmem:[%s5 + $0x10] sm:$0xff]
    %v298 = vld [vmem:[%s5 + $0x18] sm:$0xff]
    %v300 = vsel %vm163, %v291, 0
    %302 = vmatpush.msra.mxu0 0.0
    %303 = vmatpush.msra.mxu0 0.0
    %304 = vmatpush.msra.mxu0 0.0
    %305 = vmatpush.msra.mxu0 0.0
    %306 = vmatpush.msra.mxu0 0.0
    %307 = vmatpush.msra.mxu0 0.0
    %308 = vmatpush.msra.mxu0 0.0
    %309 = vmatpush.msra.mxu0 0.0
    %310 = vmatpush.msra.mxu0 0.0
    %311 = vmatpush.msra.mxu0 0.0
    %312 = vmatpush.msra.mxu0 0.0
    %313 = vmatpush.msra.mxu0 0.0
    %314 = vmatpush.msra.mxu0 %v298
    %315 = vmatpush.msra.mxu0 %v297
    %316 = vmatpush.msra.mxu0 %v296
    %317 = vmatpush.msra.mxu0 %v295
    %318 = vmatmul.f32.gmra.mxu0 %v300
    %v319 = vpop.f32.mrf.mxu0
    %v320 = vadd.f32 0.0, %v319
    %321 = vdwg.mxu0
    %v322 = vadd.f32 %v294, %v320
    %v323 = vxor.u32 %v322, 2147483648
    %v324 = vmul.f32 %v323, 1.442695
    %v325 = vpow.pop %v324
    %v326 = vadd.f32 %v325, 1.0
    %v327 = vrcp.pop %v326
    %v328 = vmul.f32 %v326, %v327
    %v329 = vsub.f32 1.0, %v328
    %v330 = vmul.f32 %v327, %v329
    %v331 = vadd.f32 %v327, %v330
    %vm332 = vweird.f32 %v326
    %vm333 = vweird.f32 %v327
    %vm334 = vmor %vm332, %vm333
    %v335 = vsel %vm334, %v327, %v331
    %v336 = vand.u32 2147483647, %v326
    %vm337 = vcmp.eq.f32.partialorder %v336, 8.507059e+37
    %v338 = vand.u32 %v326, 2147483648
    %v339 = vor.u32 1.1754944e-38, %v338
    %v340 = vsel %vm337, %v339, %v335
    %v341 = vmul.f32 1.0, %v340
    %v342 = vtanh.pop %v322
    %344 = vrot.lane.b32.xlu0 %v292, 32
    %v345 = vpop.permute.xlu0 %344
    %v347 = vmul.f32 %v341, %v345
    %349 = vrot.lane.b32.xlu0 %v342, 64
    %v350 = vpop.permute.xlu0 %349
    %v352 = vmul.f32 %v341, %v350
    %354 = vrot.lane.b32.xlu0 %v352, 32
    %v355 = vpop.permute.xlu0 %354
    %v357 = vadd.f32 %v347, %v355
    %v358 = vtanh.pop %v357
    %360 = vrot.lane.b32.xlu0 %v358, 64
    %v361 = vpop.permute.xlu0 %360
    %v363 = vmul.f32 %v341, %v361
    %365 = vrot.lane.b32.xlu0 %v363, 32
    %v366 = vpop.permute.xlu0 %365
    %368 = vst.msk [vmem:[#allocation4] sm:$0x3] %vm204, %v366
    %370 = vrot.lane.b32.xlu0 %v357, 96
    %v371 = vpop.permute.xlu0 %370
    %373 = vst.msk [vmem:[#allocation5] sm:$0x3] %vm204, %v371
    %s374 = scalar_lea.vmem [#allocation3], 2
    %375 = vst.msk [vmem:[%s374] sm:$0x3] %vm204, %v366
    %v376 = vld [vmem:[#allocation4] sm:$0x3]
    %v377 = vld [vmem:[#allocation5] sm:$0x3]
    %s378 = scalar_lea.vmem [#allocation2], 4
    %v379 = vld [vmem:[%s378] sm:$0x3]
    %v380 = vld [vmem:[%s5] sm:$0xff]
    %v381 = vld [vmem:[%s5 + $0x8] sm:$0xff]
    %v382 = vld [vmem:[%s5 + $0x10] sm:$0xff]
    %v383 = vld [vmem:[%s5 + $0x18] sm:$0xff]
    %v385 = vsel %vm163, %v376, 0
    %387 = vmatpush.msra.mxu0 0.0
    %388 = vmatpush.msra.mxu0 0.0
    %389 = vmatpush.msra.mxu0 0.0
    %390 = vmatpush.msra.mxu0 0.0
    %391 = vmatpush.msra.mxu0 0.0
    %392 = vmatpush.msra.mxu0 0.0
    %393 = vmatpush.msra.mxu0 0.0
    %394 = vmatpush.msra.mxu0 0.0
    %395 = vmatpush.msra.mxu0 0.0
    %396 = vmatpush.msra.mxu0 0.0
    %397 = vmatpush.msra.mxu0 0.0
    %398 = vmatpush.msra.mxu0 0.0
    %399 = vmatpush.msra.mxu0 %v383
    %400 = vmatpush.msra.mxu0 %v382
    %401 = vmatpush.msra.mxu0 %v381
    %402 = vmatpush.msra.mxu0 %v380
    %403 = vmatmul.f32.gmra.mxu0 %v385
    %v404 = vpop.f32.mrf.mxu0
    %v405 = vadd.f32 0.0, %v404
    %406 = vdwg.mxu0
    %v407 = vadd.f32 %v379, %v405
    %v408 = vxor.u32 %v407, 2147483648
    %v409 = vmul.f32 %v408, 1.442695
    %v410 = vpow.pop %v409
    %v411 = vadd.f32 %v410, 1.0
    %v412 = vrcp.pop %v411
    %v413 = vmul.f32 %v411, %v412
    %v414 = vsub.f32 1.0, %v413
    %v415 = vmul.f32 %v412, %v414
    %v416 = vadd.f32 %v412, %v415
    %vm417 = vweird.f32 %v411
    %vm418 = vweird.f32 %v412
    %vm419 = vmor %vm417, %vm418
    %v420 = vsel %vm419, %v412, %v416
    %v421 = vand.u32 2147483647, %v411
    %vm422 = vcmp.eq.f32.partialorder %v421, 8.507059e+37
    %v423 = vand.u32 %v411, 2147483648
    %v424 = vor.u32 1.1754944e-38, %v423
    %v425 = vsel %vm422, %v424, %v420
    %v426 = vmul.f32 1.0, %v425
    %v427 = vtanh.pop %v407
    %429 = vrot.lane.b32.xlu0 %v377, 32
    %v430 = vpop.permute.xlu0 %429
    %v432 = vmul.f32 %v426, %v430
    %434 = vrot.lane.b32.xlu0 %v427, 64
    %v435 = vpop.permute.xlu0 %434
    %v437 = vmul.f32 %v426, %v435
    %439 = vrot.lane.b32.xlu0 %v437, 32
    %v440 = vpop.permute.xlu0 %439
    %v442 = vadd.f32 %v432, %v440
    %v443 = vtanh.pop %v442
    %445 = vrot.lane.b32.xlu0 %v443, 64
    %v446 = vpop.permute.xlu0 %445
    %v448 = vmul.f32 %v426, %v446
    %450 = vrot.lane.b32.xlu0 %v448, 32
    %v451 = vpop.permute.xlu0 %450
    %453 = vst.msk [vmem:[#allocation4] sm:$0x3] %vm204, %v451
    %455 = vrot.lane.b32.xlu0 %v442, 96
    %v456 = vpop.permute.xlu0 %455
    %458 = vst.msk [vmem:[#allocation5] sm:$0x3] %vm204, %v456
    %s459 = scalar_lea.vmem [#allocation3], 4
    %460 = vst.msk [vmem:[%s459] sm:$0x3] %vm204, %v451
    %v461 = vld [vmem:[#allocation4] sm:$0x3]
    %v462 = vld [vmem:[#allocation5] sm:$0x3]
    %s463 = scalar_lea.vmem [#allocation2], 6
    %v464 = vld [vmem:[%s463] sm:$0x3]
    %v465 = vld [vmem:[%s5] sm:$0xff]
    %v466 = vld [vmem:[%s5 + $0x8] sm:$0xff]
    %v467 = vld [vmem:[%s5 + $0x10] sm:$0xff]
    %v468 = vld [vmem:[%s5 + $0x18] sm:$0xff]
    %v470 = vsel %vm163, %v461, 0
    %472 = vmatpush.msra.mxu0 0.0
    %473 = vmatpush.msra.mxu0 0.0
    %474 = vmatpush.msra.mxu0 0.0
    %475 = vmatpush.msra.mxu0 0.0
    %476 = vmatpush.msra.mxu0 0.0
    %477 = vmatpush.msra.mxu0 0.0
    %478 = vmatpush.msra.mxu0 0.0
    %479 = vmatpush.msra.mxu0 0.0
    %480 = vmatpush.msra.mxu0 0.0
    %481 = vmatpush.msra.mxu0 0.0
    %482 = vmatpush.msra.mxu0 0.0
    %483 = vmatpush.msra.mxu0 0.0
    %484 = vmatpush.msra.mxu0 %v468
    %485 = vmatpush.msra.mxu0 %v467
    %486 = vmatpush.msra.mxu0 %v466
    %487 = vmatpush.msra.mxu0 %v465
    %488 = vmatmul.f32.gmra.mxu0 %v470
    %v489 = vpop.f32.mrf.mxu0
    %v490 = vadd.f32 0.0, %v489
    %491 = vdwg.mxu0
    %v492 = vadd.f32 %v464, %v490
    %v493 = vxor.u32 %v492, 2147483648
    %v494 = vmul.f32 %v493, 1.442695
    %v495 = vpow.pop %v494
    %v496 = vadd.f32 %v495, 1.0
    %v497 = vrcp.pop %v496
    %v498 = vmul.f32 %v496, %v497
    %v499 = vsub.f32 1.0, %v498
    %v500 = vmul.f32 %v497, %v499
    %v501 = vadd.f32 %v497, %v500
    %vm502 = vweird.f32 %v496
    %vm503 = vweird.f32 %v497
    %vm504 = vmor %vm502, %vm503
    %v505 = vsel %vm504, %v497, %v501
    %v506 = vand.u32 2147483647, %v496
    %vm507 = vcmp.eq.f32.partialorder %v506, 8.507059e+37
    %v508 = vand.u32 %v496, 2147483648
    %v509 = vor.u32 1.1754944e-38, %v508
    %v510 = vsel %vm507, %v509, %v505
    %v511 = vmul.f32 1.0, %v510
    %v512 = vtanh.pop %v492
    %514 = vrot.lane.b32.xlu0 %v462, 32
    %v515 = vpop.permute.xlu0 %514
    %v517 = vmul.f32 %v511, %v515
    %519 = vrot.lane.b32.xlu0 %v512, 64
    %v520 = vpop.permute.xlu0 %519
    %v522 = vmul.f32 %v511, %v520
    %524 = vrot.lane.b32.xlu0 %v522, 32
    %v525 = vpop.permute.xlu0 %524
    %v527 = vadd.f32 %v517, %v525
    %v528 = vtanh.pop %v527
    %530 = vrot.lane.b32.xlu0 %v528, 64
    %v531 = vpop.permute.xlu0 %530
    %v533 = vmul.f32 %v511, %v531
    %535 = vrot.lane.b32.xlu0 %v533, 32
    %v536 = vpop.permute.xlu0 %535
    %538 = vst.msk [vmem:[#allocation4] sm:$0x3] %vm204, %v536
    %540 = vrot.lane.b32.xlu0 %v527, 96
    %v541 = vpop.permute.xlu0 %540
    %543 = vst.msk [vmem:[#allocation5] sm:$0x3] %vm204, %v541
    %s544 = scalar_lea.vmem [#allocation3], 6
    %545 = vst.msk [vmem:[%s544] sm:$0x3] %vm204, %v536
    %v546 = vld [vmem:[#allocation4] sm:$0x3]
    %v547 = vld [vmem:[#allocation5] sm:$0x3]
    %s548 = scalar_lea.vmem [#allocation2], 8
    %v549 = vld [vmem:[%s548] sm:$0x3]
    %v550 = vld [vmem:[%s5] sm:$0xff]
    %v551 = vld [vmem:[%s5 + $0x8] sm:$0xff]
    %v552 = vld [vmem:[%s5 + $0x10] sm:$0xff]
    %v553 = vld [vmem:[%s5 + $0x18] sm:$0xff]
    %v555 = vsel %vm163, %v546, 0
    %557 = vmatpush.msra.mxu0 0.0
    %558 = vmatpush.msra.mxu0 0.0
    %559 = vmatpush.msra.mxu0 0.0
    %560 = vmatpush.msra.mxu0 0.0
    %561 = vmatpush.msra.mxu0 0.0
    %562 = vmatpush.msra.mxu0 0.0
    %563 = vmatpush.msra.mxu0 0.0
    %564 = vmatpush.msra.mxu0 0.0
    %565 = vmatpush.msra.mxu0 0.0
    %566 = vmatpush.msra.mxu0 0.0
    %567 = vmatpush.msra.mxu0 0.0
    %568 = vmatpush.msra.mxu0 0.0
    %569 = vmatpush.msra.mxu0 %v553
    %570 = vmatpush.msra.mxu0 %v552
    %571 = vmatpush.msra.mxu0 %v551
    %572 = vmatpush.msra.mxu0 %v550
    %573 = vmatmul.f32.gmra.mxu0 %v555
    %v574 = vpop.f32.mrf.mxu0
    %v575 = vadd.f32 0.0, %v574
    %576 = vdwg.mxu0
    %v577 = vadd.f32 %v549, %v575
    %v578 = vxor.u32 %v577, 2147483648
    %v579 = vmul.f32 %v578, 1.442695
    %v580 = vpow.pop %v579
    %v581 = vadd.f32 %v580, 1.0
    %v582 = vrcp.pop %v581
    %v583 = vmul.f32 %v581, %v582
    %v584 = vsub.f32 1.0, %v583
    %v585 = vmul.f32 %v582, %v584
    %v586 = vadd.f32 %v582, %v585
    %vm587 = vweird.f32 %v581
    %vm588 = vweird.f32 %v582
    %vm589 = vmor %vm587, %vm588
    %v590 = vsel %vm589, %v582, %v586
    %v591 = vand.u32 2147483647, %v581
    %vm592 = vcmp.eq.f32.partialorder %v591, 8.507059e+37
    %v593 = vand.u32 %v581, 2147483648
    %v594 = vor.u32 1.1754944e-38, %v593
    %v595 = vsel %vm592, %v594, %v590
    %v596 = vmul.f32 1.0, %v595
    %v597 = vtanh.pop %v577
    %599 = vrot.lane.b32.xlu0 %v547, 32
    %v600 = vpop.permute.xlu0 %599
    %v602 = vmul.f32 %v596, %v600
    %604 = vrot.lane.b32.xlu0 %v597, 64
    %v605 = vpop.permute.xlu0 %604
    %v607 = vmul.f32 %v596, %v605
    %609 = vrot.lane.b32.xlu0 %v607, 32
    %v610 = vpop.permute.xlu0 %609
    %v612 = vadd.f32 %v602, %v610
    %v613 = vtanh.pop %v612
    %615 = vrot.lane.b32.xlu0 %v613, 64
    %v616 = vpop.permute.xlu0 %615
    %v618 = vmul.f32 %v596, %v616
    %620 = vrot.lane.b32.xlu0 %v618, 32
    %v621 = vpop.permute.xlu0 %620
    %623 = vst.msk [vmem:[#allocation4] sm:$0x3] %vm204, %v621
    %625 = vrot.lane.b32.xlu0 %v612, 96
    %v626 = vpop.permute.xlu0 %625
    %628 = vst.msk [vmem:[#allocation5] sm:$0x3] %vm204, %v626
    %s629 = scalar_lea.vmem [#allocation3], 8
    %630 = vst.msk [vmem:[%s629] sm:$0x3] %vm204, %v621
    %v631 = vld [vmem:[#allocation4] sm:$0x3]
    %v632 = vld [vmem:[#allocation5] sm:$0x3]
    %s633 = scalar_lea.vmem [#allocation2], 10
    %v634 = vld [vmem:[%s633] sm:$0x3]
    %v635 = vld [vmem:[%s5] sm:$0xff]
    %v636 = vld [vmem:[%s5 + $0x8] sm:$0xff]
    %v637 = vld [vmem:[%s5 + $0x10] sm:$0xff]
    %v638 = vld [vmem:[%s5 + $0x18] sm:$0xff]
    %v640 = vsel %vm163, %v631, 0
    %642 = vmatpush.msra.mxu0 0.0
    %643 = vmatpush.msra.mxu0 0.0
    %644 = vmatpush.msra.mxu0 0.0
    %645 = vmatpush.msra.mxu0 0.0
    %646 = vmatpush.msra.mxu0 0.0
    %647 = vmatpush.msra.mxu0 0.0
    %648 = vmatpush.msra.mxu0 0.0
    %649 = vmatpush.msra.mxu0 0.0
    %650 = vmatpush.msra.mxu0 0.0
    %651 = vmatpush.msra.mxu0 0.0
    %652 = vmatpush.msra.mxu0 0.0
    %653 = vmatpush.msra.mxu0 0.0
    %654 = vmatpush.msra.mxu0 %v638
    %655 = vmatpush.msra.mxu0 %v637
    %656 = vmatpush.msra.mxu0 %v636
    %657 = vmatpush.msra.mxu0 %v635
    %658 = vmatmul.f32.gmra.mxu0 %v640
    %v659 = vpop.f32.mrf.mxu0
    %v660 = vadd.f32 0.0, %v659
    %661 = vdwg.mxu0
    %v662 = vadd.f32 %v634, %v660
    %v663 = vxor.u32 %v662, 2147483648
    %v664 = vmul.f32 %v663, 1.442695
    %v665 = vpow.pop %v664
    %v666 = vadd.f32 %v665, 1.0
    %v667 = vrcp.pop %v666
    %v668 = vmul.f32 %v666, %v667
    %v669 = vsub.f32 1.0, %v668
    %v670 = vmul.f32 %v667, %v669
    %v671 = vadd.f32 %v667, %v670
    %vm672 = vweird.f32 %v666
    %vm673 = vweird.f32 %v667
    %vm674 = vmor %vm672, %vm673
    %v675 = vsel %vm674, %v667, %v671
    %v676 = vand.u32 2147483647, %v666
    %vm677 = vcmp.eq.f32.partialorder %v676, 8.507059e+37
    %v678 = vand.u32 %v666, 2147483648
    %v679 = vor.u32 1.1754944e-38, %v678
    %v680 = vsel %vm677, %v679, %v675
    %v681 = vmul.f32 1.0, %v680
    %v682 = vtanh.pop %v662
    %684 = vrot.lane.b32.xlu0 %v632, 32
    %v685 = vpop.permute.xlu0 %684
    %v687 = vmul.f32 %v681, %v685
    %689 = vrot.lane.b32.xlu0 %v682, 64
    %v690 = vpop.permute.xlu0 %689
    %v692 = vmul.f32 %v681, %v690
    %694 = vrot.lane.b32.xlu0 %v692, 32
    %v695 = vpop.permute.xlu0 %694
    %v697 = vadd.f32 %v687, %v695
    %v698 = vtanh.pop %v697
    %700 = vrot.lane.b32.xlu0 %v698, 64
    %v701 = vpop.permute.xlu0 %700
    %v703 = vmul.f32 %v681, %v701
    %705 = vrot.lane.b32.xlu0 %v703, 32
    %v706 = vpop.permute.xlu0 %705
    %708 = vst.msk [vmem:[#allocation4] sm:$0x3] %vm204, %v706
    %710 = vrot.lane.b32.xlu0 %v697, 96
    %v711 = vpop.permute.xlu0 %710
    %713 = vst.msk [vmem:[#allocation5] sm:$0x3] %vm204, %v711
    %s714 = scalar_lea.vmem [#allocation3], 10
    %715 = vst.msk [vmem:[%s714] sm:$0x3] %vm204, %v706
    %v716 = vld [vmem:[#allocation4] sm:$0x3]
    %v717 = vld [vmem:[#allocation5] sm:$0x3]
    %s718 = scalar_lea.vmem [#allocation2], 12
    %v719 = vld [vmem:[%s718] sm:$0x3]
    %v720 = vld [vmem:[%s5] sm:$0xff]
    %v721 = vld [vmem:[%s5 + $0x8] sm:$0xff]
    %v722 = vld [vmem:[%s5 + $0x10] sm:$0xff]
    %v723 = vld [vmem:[%s5 + $0x18] sm:$0xff]
    %v725 = vsel %vm163, %v716, 0
    %727 = vmatpush.msra.mxu0 0.0
    %728 = vmatpush.msra.mxu0 0.0
    %729 = vmatpush.msra.mxu0 0.0
    %730 = vmatpush.msra.mxu0 0.0
    %731 = vmatpush.msra.mxu0 0.0
    %732 = vmatpush.msra.mxu0 0.0
    %733 = vmatpush.msra.mxu0 0.0
    %734 = vmatpush.msra.mxu0 0.0
    %735 = vmatpush.msra.mxu0 0.0
    %736 = vmatpush.msra.mxu0 0.0
    %737 = vmatpush.msra.mxu0 0.0
    %738 = vmatpush.msra.mxu0 0.0
    %739 = vmatpush.msra.mxu0 %v723
    %740 = vmatpush.msra.mxu0 %v722
    %741 = vmatpush.msra.mxu0 %v721
    %742 = vmatpush.msra.mxu0 %v720
    %743 = vmatmul.f32.gmra.mxu0 %v725
    %v744 = vpop.f32.mrf.mxu0
    %v745 = vadd.f32 0.0, %v744
    %746 = vdwg.mxu0
    %v747 = vadd.f32 %v719, %v745
    %v748 = vxor.u32 %v747, 2147483648
    %v749 = vmul.f32 %v748, 1.442695
    %v750 = vpow.pop %v749
    %v751 = vadd.f32 %v750, 1.0
    %v752 = vrcp.pop %v751
    %v753 = vmul.f32 %v751, %v752
    %v754 = vsub.f32 1.0, %v753
    %v755 = vmul.f32 %v752, %v754
    %v756 = vadd.f32 %v752, %v755
    %vm757 = vweird.f32 %v751
    %vm758 = vweird.f32 %v752
    %vm759 = vmor %vm757, %vm758
    %v760 = vsel %vm759, %v752, %v756
    %v761 = vand.u32 2147483647, %v751
    %vm762 = vcmp.eq.f32.partialorder %v761, 8.507059e+37
    %v763 = vand.u32 %v751, 2147483648
    %v764 = vor.u32 1.1754944e-38, %v763
    %v765 = vsel %vm762, %v764, %v760
    %v766 = vmul.f32 1.0, %v765
    %v767 = vtanh.pop %v747
    %769 = vrot.lane.b32.xlu0 %v717, 32
    %v770 = vpop.permute.xlu0 %769
    %v772 = vmul.f32 %v766, %v770
    %774 = vrot.lane.b32.xlu0 %v767, 64
    %v775 = vpop.permute.xlu0 %774
    %v777 = vmul.f32 %v766, %v775
    %779 = vrot.lane.b32.xlu0 %v777, 32
    %v780 = vpop.permute.xlu0 %779
    %v782 = vadd.f32 %v772, %v780
    %v783 = vtanh.pop %v782
    %785 = vrot.lane.b32.xlu0 %v783, 64
    %v786 = vpop.permute.xlu0 %785
    %v788 = vmul.f32 %v766, %v786
    %790 = vrot.lane.b32.xlu0 %v788, 32
    %v791 = vpop.permute.xlu0 %790
    %793 = vst.msk [vmem:[#allocation4] sm:$0x3] %vm204, %v791
    %795 = vrot.lane.b32.xlu0 %v782, 96
    %v796 = vpop.permute.xlu0 %795
    %798 = vst.msk [vmem:[#allocation5] sm:$0x3] %vm204, %v796
    %s799 = scalar_lea.vmem [#allocation3], 12
    %800 = vst.msk [vmem:[%s799] sm:$0x3] %vm204, %v791
    %v801 = vld [vmem:[#allocation4] sm:$0x3]
    %v802 = vld [vmem:[#allocation5] sm:$0x3]
    %s803 = scalar_lea.vmem [#allocation2], 14
    %v804 = vld [vmem:[%s803] sm:$0x3]
    %v805 = vld [vmem:[%s5] sm:$0xff]
    %v806 = vld [vmem:[%s5 + $0x8] sm:$0xff]
    %v807 = vld [vmem:[%s5 + $0x10] sm:$0xff]
    %v808 = vld [vmem:[%s5 + $0x18] sm:$0xff]
    %v810 = vsel %vm163, %v801, 0
    %812 = vmatpush.msra.mxu0 0.0
    %813 = vmatpush.msra.mxu0 0.0
    %814 = vmatpush.msra.mxu0 0.0
    %815 = vmatpush.msra.mxu0 0.0
    %816 = vmatpush.msra.mxu0 0.0
    %817 = vmatpush.msra.mxu0 0.0
    %818 = vmatpush.msra.mxu0 0.0
    %819 = vmatpush.msra.mxu0 0.0
    %820 = vmatpush.msra.mxu0 0.0
    %821 = vmatpush.msra.mxu0 0.0
    %822 = vmatpush.msra.mxu0 0.0
    %823 = vmatpush.msra.mxu0 0.0
    %824 = vmatpush.msra.mxu0 %v808
    %825 = vmatpush.msra.mxu0 %v807
    %826 = vmatpush.msra.mxu0 %v806
    %827 = vmatpush.msra.mxu0 %v805
    %828 = vmatmul.f32.gmra.mxu0 %v810
    %v829 = vpop.f32.mrf.mxu0
    %v830 = vadd.f32 0.0, %v829
    %831 = vdwg.mxu0
    %v832 = vadd.f32 %v804, %v830
    %v833 = vxor.u32 %v832, 2147483648
    %v834 = vmul.f32 %v833, 1.442695
    %v835 = vpow.pop %v834
    %v836 = vadd.f32 %v835, 1.0
    %v837 = vrcp.pop %v836
    %v838 = vmul.f32 %v836, %v837
    %v839 = vsub.f32 1.0, %v838
    %v840 = vmul.f32 %v837, %v839
    %v841 = vadd.f32 %v837, %v840
    %vm842 = vweird.f32 %v836
    %vm843 = vweird.f32 %v837
    %vm844 = vmor %vm842, %vm843
    %v845 = vsel %vm844, %v837, %v841
    %v846 = vand.u32 2147483647, %v836
    %vm847 = vcmp.eq.f32.partialorder %v846, 8.507059e+37
    %v848 = vand.u32 %v836, 2147483648
    %v849 = vor.u32 1.1754944e-38, %v848
    %v850 = vsel %vm847, %v849, %v845
    %v851 = vmul.f32 1.0, %v850
    %v852 = vtanh.pop %v832
    %854 = vrot.lane.b32.xlu0 %v802, 32
    %v855 = vpop.permute.xlu0 %854
    %v857 = vmul.f32 %v851, %v855
    %859 = vrot.lane.b32.xlu0 %v852, 64
    %v860 = vpop.permute.xlu0 %859
    %v862 = vmul.f32 %v851, %v860
    %864 = vrot.lane.b32.xlu0 %v862, 32
    %v865 = vpop.permute.xlu0 %864
    %v867 = vadd.f32 %v857, %v865
    %v868 = vtanh.pop %v867
    %870 = vrot.lane.b32.xlu0 %v868, 64
    %v871 = vpop.permute.xlu0 %870
    %v873 = vmul.f32 %v851, %v871
    %875 = vrot.lane.b32.xlu0 %v873, 32
    %v876 = vpop.permute.xlu0 %875
    %878 = vst.msk [vmem:[#allocation4] sm:$0x3] %vm204, %v876
    %880 = vrot.lane.b32.xlu0 %v867, 96
    %v881 = vpop.permute.xlu0 %880
    %883 = vst.msk [vmem:[#allocation5] sm:$0x3] %vm204, %v881
    %s884 = scalar_lea.vmem [#allocation3], 14
    %885 = vst.msk [vmem:[%s884] sm:$0x3] %vm204, %v876
    %v886 = vld [vmem:[#allocation3] sm:$0x3]
    %v887 = vld [vmem:[#allocation3 + $0x2] sm:$0x3]
    %v888 = vld [vmem:[#allocation3 + $0x4] sm:$0x3]
    %v889 = vld [vmem:[#allocation3 + $0x6] sm:$0x3]
    %v890 = vld [vmem:[#allocation3 + $0x8] sm:$0x3]
    %v891 = vld [vmem:[#allocation3 + $0xa] sm:$0x3]
    %v892 = vld [vmem:[#allocation3 + $0xc] sm:$0x3]
    %v893 = vld [vmem:[#allocation3 + $0xe] sm:$0x3]
    %902 = vst [vmem:[#allocation1] ss:$4 sm:$0xff] %v886
    %s903 = scalar_lea.vmem [#allocation1], 1
    %904 = vst [vmem:[%s903] ss:$4 sm:$0xff] %v887
    %s905 = scalar_lea.vmem [#allocation1], 2
    %906 = vst [vmem:[%s905] ss:$4 sm:$0xff] %v888
    %s907 = scalar_lea.vmem [#allocation1], 3
    %908 = vst [vmem:[%s907] ss:$4 sm:$0xff] %v889
    %s909 = scalar_lea.vmem [#allocation1], 32
    %910 = vst [vmem:[%s909] ss:$4 sm:$0xff] %v890
    %s911 = scalar_lea.vmem [#allocation1], 33
    %912 = vst [vmem:[%s911] ss:$4 sm:$0xff] %v891
    %s913 = scalar_lea.vmem [#allocation1], 34
    %914 = vst [vmem:[%s913] ss:$4 sm:$0xff] %v892
    %s915 = scalar_lea.vmem [#allocation1], 35
    %916 = vst [vmem:[%s915] ss:$4 sm:$0xff] %v893
    %v917 = vld.sshfl [vmem:[#allocation1] sm:$0xff pattern:$0x73625140]
    %v918 = vld.sshfl [vmem:[#allocation1 + $0x20] sm:$0xff pattern:$0x73625140]
    %v921 = vpack.c.bf16 %v918, %v917
    %v922 = vld [vmem:[%s6] sm:$0xf]
    %v923 = vld [vmem:[%s6 + $0x4] sm:$0xf]
    %v924 = vld [vmem:[%s6 + $0x8] sm:$0xf]
    %v925 = vld [vmem:[%s6 + $0xc] sm:$0xf]
    %v926 = vld [vmem:[%s7] sm:$0x1]
    %v928 = vperm.slane %v926, 0
    %v934 = vunpack.c.l.b16 %v922
    %v935 = vunpack.c.l.b16 %v923
    %v936 = vunpack.c.l.b16 %v924
    %v937 = vunpack.c.l.b16 %v925
    %v938 = vpack.c.b16 %v935, %v934
    %v939 = vpack.c.b16 %v937, %v936
    %v943 = vsel %vm163, %v921, 0
    %945 = vmatpush.bf16.msra.mxu0 0
    %946 = vmatpush.bf16.msra.mxu0 0
    %947 = vmatpush.bf16.msra.mxu0 0
    %948 = vmatpush.bf16.msra.mxu0 0
    %949 = vmatpush.bf16.msra.mxu0 0
    %950 = vmatpush.bf16.msra.mxu0 0
    %951 = vmatpush.bf16.msra.mxu0 %v939
    %952 = vmatpush.bf16.msra.mxu0 %v938
    %953 = vmatmul.bf16.gmra.mxu0 %v943
    %v954 = vpop.f32.mrf.mxu0
    %v955 = vadd.f32 %v928, %v954
    %v956 = vpop.f32.mrf.mxu0
    %v957 = vadd.f32 %v928, %v956
    %958 = vdwg.mxu0
    %v961 = vrot.slane %v955, 2
    %v962 = vrot.slane %v955, 4
    %v963 = vrot.slane %v955, 6
    %v964 = vrot.slane %v957, 2
    %v965 = vrot.slane %v957, 4
    %v966 = vrot.slane %v957, 6
    %973 = vst [vmem:[#allocation6] sm:$0x3] %v955
    %974 = vst [vmem:[#allocation6 + $0x2] sm:$0x3] %v961
    %975 = vst [vmem:[#allocation6 + $0x4] sm:$0x3] %v962
    %976 = vst [vmem:[#allocation6 + $0x6] sm:$0x3] %v963
    %977 = vst [vmem:[#allocation6 + $0x8] sm:$0x3] %v957
    %978 = vst [vmem:[#allocation6 + $0xa] sm:$0x3] %v964
    %979 = vst [vmem:[#allocation6 + $0xc] sm:$0x3] %v965
    %980 = vst [vmem:[#allocation6 + $0xe] sm:$0x3] %v966
    // Predicated region
    $region34: #{tpu_custom_call.1} parent=1 // pred_check
      _
    $region35: #{tpu_custom_call.1} parent=1 // pred_check_branch
      %982 = sbr.rel (0) target = $region37
    $region36: #{tpu_custom_call.1} parent=1 // pred_region
      %984 = vsyncadd [#allocation7], 0
      %s985 = sshll.u32 [#allocation6], 4
      %s986 = int_to_ptr.vmem [resolvable:$true] %s985
      %s987 = sshll.u32 %s8, 4
      %s988 = int_to_ptr.hbm [resolvable:$true] %s987
      %993 = dma.vmem_to_hbm [thread:$0]  %s986, 256, %s988, [#allocation7], 32, 32, 2
    $region37: #{tpu_custom_call.1} parent=1 // pred_fallthru
      _
    // Predicated region
    $region38: #{tpu_custom_call.1} parent=1 // pred_check
      _
    $region39: #{tpu_custom_call.1} parent=1 // pred_check_branch
      %995 = sbr.rel (0) target = $region41
    $region40: #{tpu_custom_call.1} parent=1 // pred_region
      %997 = dma.done [#allocation7], 256
    $region41: #{tpu_custom_call.1} parent=1 // pred_fallthru
      _
    %998 = vsyncpa [#allocation7], 1

</llo_original>
